<compile_context>
chip_gen: v5e
topology: v5e:2x2
jax: 0.10.0
libtpu: 0.0.40
codegen_flags: <defaults>
</compile_context>

<pallas_src>
import jax
import jax.numpy as jnp
from jax.experimental import pallas as pl
from jax.experimental.pallas import tpu as pltpu

# ----- model dims (shrunk from PyTorch defaults 1000/1000/256/8 to toy sizes) -----
B, T = 2, 4            # batch, sequence length
B_PAD = 8              # batch padded to a full sublane -> (8,128)-aligned per-step tiles
C, HI, WI = 3, 16, 16  # per-frame image (C, H, W)
D_IN = C * HI * WI     # 768, flattened frame
D_FEAT = 128           # lstm_input_dim   (PyTorch: 1000)
H_LSTM = 128           # lstm_hidden_dim  (PyTorch: 1000)
H_FC = 128             # h_fc_dim         (PyTorch: 256)
N_OUT = 8              # n_output
N_PAD = 128            # fc3 output padded to a full lane width
EPS = 1e-5


# --------------------------------------------------------------------------
# Fused kernel: embed (backbone+fc1+bn1 folded, relu)  ->  LSTM  ->  head
# Rows are time-major: row t*B_PAD + b corresponds to (frame t, batch b).
# Wih/Whh/W2/W3 arrive as raw HBM refs and are prefetched while embed runs.
# --------------------------------------------------------------------------
def fused_kernel(x_ref, we_ref, be_ref, wih_hbm, whh_hbm, bl_ref,
                 w2_hbm, b2_ref, w3_hbm, b3_ref, o_ref,
                 wih_v, whh_v, w2_v, w3_v, sem):
    # ---- start weight prefetch (overlaps with the embed matmul below) ----
    cp_ih = pltpu.make_async_copy(wih_hbm, wih_v, sem.at[0])
    cp_hh = pltpu.make_async_copy(whh_hbm, whh_v, sem.at[1])
    cp_w2 = pltpu.make_async_copy(w2_hbm, w2_v, sem.at[2])
    cp_w3 = pltpu.make_async_copy(w3_hbm, w3_v, sem.at[3])
    cp_ih.start(); cp_hh.start(); cp_w2.start(); cp_w3.start()

    # ---- embed: relu(bn1(fc1(backbone(x)))) — all linears + BN pre-folded ----
    # bf16 x bf16 -> f32 accumulate on the MXU.
    feat = jnp.dot(x_ref[...], we_ref[...], preferred_element_type=jnp.float32)
    feat = jnp.maximum(feat + be_ref[...], 0.0)                 # (T*8, D_FEAT) f32
    feat_b = feat.astype(jnp.bfloat16)

    # ---- LSTM input projection hoisted out of the recurrence ----
    cp_ih.wait()
    gates_x = jnp.dot(feat_b, wih_v[...], preferred_element_type=jnp.float32)
    gates_x = gates_x + bl_ref[...]                             # (T*8, 4H) f32

    cp_hh.wait()
    whh = whh_v[...]                                            # (H, 4H) bf16
    Hh = H_LSTM
    h = jnp.zeros((B_PAD, Hh), jnp.float32)
    c = jnp.zeros((B_PAD, Hh), jnp.float32)
    hs = []

    # T is static and tiny: full unroll -> scheduler can overlap the Whh matmul
    # of step t with the VPU/EUP gate math of step t-1.  All slices are full
    # (8,128)-aligned tiles (batch padded to 8 sublanes), gate math stays f32.
    for t in range(T):                                          # static unroll
        g = gates_x[t * B_PAD:(t + 1) * B_PAD, :] + jnp.dot(
            h.astype(jnp.bfloat16), whh,
            preferred_element_type=jnp.float32)                 # (8, 4H) f32
        i_g = jax.nn.sigmoid(g[:, 0:Hh])                        # PyTorch order
        f_g = jax.nn.sigmoid(g[:, Hh:2 * Hh])                   # i, f, g, o
        g_g = jnp.tanh(g[:, 2 * Hh:3 * Hh])
        o_g = jax.nn.sigmoid(g[:, 3 * Hh:4 * Hh])
        c = f_g * c + i_g * g_g
        h = o_g * jnp.tanh(c)
        hs.append(h)                                            # stays in registers

    # ---- head on the full slab: relu(bn2(fc2(h))); dropout = identity; fc3 ----
    h_all = jnp.concatenate(hs, axis=0).astype(jnp.bfloat16)    # (T*8, H)
    cp_w2.wait()
    y = jnp.dot(h_all, w2_v[...], preferred_element_type=jnp.float32)
    y = jnp.maximum(y + b2_ref[...], 0.0).astype(jnp.bfloat16)
    cp_w3.wait()
    out = jnp.dot(y, w3_v[...], preferred_element_type=jnp.float32)
    o_ref[...] = out + b3_ref[...]                              # (T*8, 128) unmasked store


def _cost_estimate():
    rows = T * B_PAD
    mm = (D_IN * D_FEAT + D_FEAT * 4 * H_LSTM + H_LSTM * 4 * H_LSTM
          + H_LSTM * H_FC + H_FC * N_PAD)
    flops = 2 * rows * mm
    transcendentals = rows * 5 * H_LSTM                         # 3 sigmoid + 2 tanh / row
    bytes_accessed = (rows * D_IN * 2 + mm * 2                  # bf16 x + weights
                      + (D_FEAT + 4 * H_LSTM + H_FC + N_PAD) * 4
                      + rows * N_PAD * 4)                       # f32 biases + output
    return pl.CostEstimate(flops=flops, transcendentals=transcendentals,
                           bytes_accessed=bytes_accessed)


def run_fused(x_tb, fp):
    vmem = pltpu.MemorySpace.VMEM
    return pl.pallas_call(
        fused_kernel,
        out_shape=jax.ShapeDtypeStruct((T * B_PAD, N_PAD), jnp.float32),
        in_specs=[
            pl.BlockSpec(memory_space=vmem),     # x
            pl.BlockSpec(memory_space=vmem),     # We (needed immediately)
            pl.BlockSpec(memory_space=vmem),     # be
            pl.BlockSpec(memory_space=pl.ANY),   # Wih  (prefetched in-kernel)
            pl.BlockSpec(memory_space=pl.ANY),   # Whh  (prefetched in-kernel)
            pl.BlockSpec(memory_space=vmem),     # b_lstm
            pl.BlockSpec(memory_space=pl.ANY),   # W2f  (prefetched in-kernel)
            pl.BlockSpec(memory_space=vmem),     # b2f
            pl.BlockSpec(memory_space=pl.ANY),   # W3p  (prefetched in-kernel)
            pl.BlockSpec(memory_space=vmem),     # b3p
        ],
        out_specs=pl.BlockSpec(memory_space=vmem),
        scratch_shapes=[
            pltpu.VMEM((D_FEAT, 4 * H_LSTM), jnp.bfloat16),     # Wih
            pltpu.VMEM((H_LSTM, 4 * H_LSTM), jnp.bfloat16),     # Whh
            pltpu.VMEM((H_LSTM, H_FC), jnp.bfloat16),           # W2f
            pltpu.VMEM((H_FC, N_PAD), jnp.bfloat16),            # W3p
            pltpu.SemaphoreType.DMA((4,)),
        ],
        cost_estimate=_cost_estimate(),
    )(x_tb, fp["We"], fp["be"], fp["Wih"], fp["Whh"], fp["b_lstm"],
      fp["W2f"], fp["b2f"], fp["W3p"], fp["b3p"])


# --------------------------------------------------------------------------
# Full forward (only tiny layout glue outside the kernel)
# --------------------------------------------------------------------------
def kinematic_lstm_forward(X_3d, folded):
    b, t = X_3d.shape[0], X_3d.shape[1]
    # Time-major layout (mirrors the per-t loop of the reference); pad the
    # batch to 8 rows per step so every in-kernel tile is (8,128)-aligned.
    x_tb = jnp.swapaxes(X_3d.reshape(b, t, -1), 0, 1)           # (T, B, D_IN)
    x_tb = jnp.pad(x_tb, ((0, 0), (0, B_PAD - b), (0, 0)))      # (T, 8, D_IN)
    x_tb = x_tb.reshape(t * B_PAD, -1).astype(jnp.bfloat16)
    out_pad = run_fused(x_tb, folded)                           # (T*8, 128), t-major
    out = out_pad[:, :N_OUT].reshape(t, B_PAD, N_OUT)[:, :b, :] # drop pads + pad lanes
    out = jnp.swapaxes(out, 0, 1)                               # (B, T, N_OUT) — tiny
    return out.reshape(b, t * N_OUT)                            # == .view(B, -1)


# --------------------------------------------------------------------------
# Deterministic parameter init (PyTorch-like layout) + eval-mode folding
# --------------------------------------------------------------------------
def make_params(key):
    ks = jax.random.split(key, 8)
    s = 0.05
    return {
        # ResNet-18 stand-in projection (see TODO above)
        "Wb": s * jax.random.normal(ks[0], (D_IN, D_FEAT), jnp.float32),
        "bb": jnp.zeros((1, D_FEAT), jnp.float32),
        # fc1 + bn1 (eval-mode running stats)
        "W1": s * jax.random.normal(ks[1], (D_FEAT, D_FEAT), jnp.float32),
        "b1": s * jax.random.normal(ks[2], (1, D_FEAT), jnp.float32),
        "g1": jnp.ones((1, D_FEAT), jnp.float32),
        "be1": jnp.zeros((1, D_FEAT), jnp.float32),
        "m1": jnp.zeros((1, D_FEAT), jnp.float32),
        "v1": jnp.ones((1, D_FEAT), jnp.float32),
        # LSTM (gate order i,f,g,o), biases b_ih + b_hh folded together
        "Wih": s * jax.random.normal(ks[3], (D_FEAT, 4 * H_LSTM), jnp.float32),
        "Whh": s * jax.random.normal(ks[4], (H_LSTM, 4 * H_LSTM), jnp.float32),
        "b_lstm": s * jax.random.normal(ks[5], (1, 4 * H_LSTM), jnp.float32),
        # fc2 + bn2
        "W2": s * jax.random.normal(ks[6], (H_LSTM, H_FC), jnp.float32),
        "b2": jnp.zeros((1, H_FC), jnp.float32),
        "g2": jnp.ones((1, H_FC), jnp.float32),
        "be2": jnp.zeros((1, H_FC), jnp.float32),
        "m2": jnp.zeros((1, H_FC), jnp.float32),
        "v2": jnp.ones((1, H_FC), jnp.float32),
        # fc3
        "W3": s * jax.random.normal(ks[7], (H_FC, N_OUT), jnp.float32),
        "b3": jnp.zeros((1, N_OUT), jnp.float32),
    }


def fold_params(p):
    """Fold eval-mode BN into the adjacent linears, fold backbone@fc1, pad fc3.

    Weight matrices are stored in bf16 (MXU-native, half the DMA); biases stay
    f32 since they are added after the f32-accumulated matmuls.
    """
    # bn1(fc1(z)) = z @ (W1*s1) + ((b1 - m1)*s1 + beta1)
    s1 = p["g1"] / jnp.sqrt(p["v1"] + EPS)
    W1f = p["W1"] * s1
    b1f = (p["b1"] - p["m1"]) * s1 + p["be1"]
    # backbone stand-in is linear -> fold the two back-to-back matmuls (exact here)
    We = p["Wb"] @ W1f
    be = p["bb"] @ W1f + b1f
    # bn2(fc2(h)) fold
    s2 = p["g2"] / jnp.sqrt(p["v2"] + EPS)
    W2f = p["W2"] * s2
    b2f = (p["b2"] - p["m2"]) * s2 + p["be2"]
    # pad fc3 to 128 output lanes for a lane-dense final store
    W3p = jnp.zeros((H_FC, N_PAD), jnp.float32).at[:, :N_OUT].set(p["W3"])
    b3p = jnp.zeros((1, N_PAD), jnp.float32).at[:, :N_OUT].set(p["b3"])
    bf16 = jnp.bfloat16
    return {"We": We.astype(bf16), "be": be,
            "Wih": p["Wih"].astype(bf16), "Whh": p["Whh"].astype(bf16),
            "b_lstm": p["b_lstm"],
            "W2f": W2f.astype(bf16), "b2f": b2f,
            "W3p": W3p.astype(bf16), "b3p": b3p}


if __name__ == "__main__":
    key = jax.random.PRNGKey(0)
    pkey, xkey = jax.random.split(key)
    params = fold_params(make_params(pkey))
    # X_3d: (B, T, C, H, W) video clip
    X_3d = jax.random.normal(xkey, (B, T, C, HI, WI), jnp.float32)

    out = jax.jit(kinematic_lstm_forward)(X_3d, params)
    out = jax.block_until_ready(out)
    assert out.shape == (B, T * N_OUT), out.shape
    assert bool(jnp.all(jnp.isfinite(out)))
    print("KERNEL_OK")
</pallas_src>

<mosaic_0001>
module attributes {stable_mosaic.version = 11 : i64} {
  func.func @fused_kernel(%arg0: memref<32x768xbf16, #tpu.memory_space<vmem>>, %arg1: memref<768x128xbf16, #tpu.memory_space<vmem>>, %arg2: memref<1x128xf32, #tpu.memory_space<vmem>>, %arg3: memref<128x512xbf16, #tpu.memory_space<any>>, %arg4: memref<128x512xbf16, #tpu.memory_space<any>>, %arg5: memref<1x512xf32, #tpu.memory_space<vmem>>, %arg6: memref<128x128xbf16, #tpu.memory_space<any>>, %arg7: memref<1x128xf32, #tpu.memory_space<vmem>>, %arg8: memref<128x128xbf16, #tpu.memory_space<any>>, %arg9: memref<1x128xf32, #tpu.memory_space<vmem>>, %arg10: memref<32x128xf32, #tpu.memory_space<vmem>>, %arg11: memref<128x512xbf16, #tpu.memory_space<vmem>>, %arg12: memref<128x512xbf16, #tpu.memory_space<vmem>>, %arg13: memref<128x128xbf16, #tpu.memory_space<vmem>>, %arg14: memref<128x128xbf16, #tpu.memory_space<vmem>>, %arg15: memref<4x!tpu.dma_semaphore, #tpu.memory_space<semaphore_mem>>) attributes {dimension_semantics = [], scalar_prefetch = 0 : i64, scratch_operands = 5 : i64, tpu.core_type = #tpu.core_type<tc>} {
    %c0_i32 = arith.constant 0 : i32
    %0 = tpu.memref_slice %arg15[%c0_i32] : memref<4x!tpu.dma_semaphore, #tpu.memory_space<semaphore_mem>> -> memref<1x!tpu.dma_semaphore, #tpu.memory_space<semaphore_mem>>
    %1 = tpu.memref_squeeze %0 : memref<1x!tpu.dma_semaphore, #tpu.memory_space<semaphore_mem>> -> memref<!tpu.dma_semaphore, #tpu.memory_space<semaphore_mem>>
    tpu.enqueue_dma source(%arg3 : memref<128x512xbf16, #tpu.memory_space<any>>) target(%arg11 : memref<128x512xbf16, #tpu.memory_space<vmem>>) target_semaphore(%1 : memref<!tpu.dma_semaphore, #tpu.memory_space<semaphore_mem>>)
    %c1_i32 = arith.constant 1 : i32
    %2 = tpu.memref_slice %arg15[%c1_i32] : memref<4x!tpu.dma_semaphore, #tpu.memory_space<semaphore_mem>> -> memref<1x!tpu.dma_semaphore, #tpu.memory_space<semaphore_mem>>
    %3 = tpu.memref_squeeze %2 : memref<1x!tpu.dma_semaphore, #tpu.memory_space<semaphore_mem>> -> memref<!tpu.dma_semaphore, #tpu.memory_space<semaphore_mem>>
    tpu.enqueue_dma source(%arg4 : memref<128x512xbf16, #tpu.memory_space<any>>) target(%arg12 : memref<128x512xbf16, #tpu.memory_space<vmem>>) target_semaphore(%3 : memref<!tpu.dma_semaphore, #tpu.memory_space<semaphore_mem>>)
    %c2_i32 = arith.constant 2 : i32
    %4 = tpu.memref_slice %arg15[%c2_i32] : memref<4x!tpu.dma_semaphore, #tpu.memory_space<semaphore_mem>> -> memref<1x!tpu.dma_semaphore, #tpu.memory_space<semaphore_mem>>
    %5 = tpu.memref_squeeze %4 : memref<1x!tpu.dma_semaphore, #tpu.memory_space<semaphore_mem>> -> memref<!tpu.dma_semaphore, #tpu.memory_space<semaphore_mem>>
    tpu.enqueue_dma source(%arg6 : memref<128x128xbf16, #tpu.memory_space<any>>) target(%arg13 : memref<128x128xbf16, #tpu.memory_space<vmem>>) target_semaphore(%5 : memref<!tpu.dma_semaphore, #tpu.memory_space<semaphore_mem>>)
    %c3_i32 = arith.constant 3 : i32
    %6 = tpu.memref_slice %arg15[%c3_i32] : memref<4x!tpu.dma_semaphore, #tpu.memory_space<semaphore_mem>> -> memref<1x!tpu.dma_semaphore, #tpu.memory_space<semaphore_mem>>
    %7 = tpu.memref_squeeze %6 : memref<1x!tpu.dma_semaphore, #tpu.memory_space<semaphore_mem>> -> memref<!tpu.dma_semaphore, #tpu.memory_space<semaphore_mem>>
    tpu.enqueue_dma source(%arg8 : memref<128x128xbf16, #tpu.memory_space<any>>) target(%arg14 : memref<128x128xbf16, #tpu.memory_space<vmem>>) target_semaphore(%7 : memref<!tpu.dma_semaphore, #tpu.memory_space<semaphore_mem>>)
    %c0 = arith.constant 0 : index
    %c0_0 = arith.constant 0 : index
    %8 = vector.load %arg0[%c0, %c0_0] : memref<32x768xbf16, #tpu.memory_space<vmem>>, vector<32x768xbf16>
    %c0_1 = arith.constant 0 : index
    %c0_2 = arith.constant 0 : index
    %9 = vector.load %arg1[%c0_1, %c0_2] : memref<768x128xbf16, #tpu.memory_space<vmem>>, vector<768x128xbf16>
    %cst = arith.constant dense<0.000000e+00> : vector<32x128xf32>
    %10 = tpu.matmul %8, %9, %cst {dimension_numbers = #tpu.dot_dimension_numbers<[1], [0], [0], [1], [0, 0, 1, 1], [], []>} : vector<32x768xbf16>, vector<768x128xbf16>, vector<32x128xf32> -> vector<32x128xf32>
    %c0_3 = arith.constant 0 : index
    %c0_4 = arith.constant 0 : index
    %11 = vector.load %arg2[%c0_3, %c0_4] : memref<1x128xf32, #tpu.memory_space<vmem>>, vector<1x128xf32>
    %12 = vector.broadcast %11 : vector<1x128xf32> to vector<32x128xf32>
    %13 = arith.addf %10, %12 : vector<32x128xf32>
    %cst_5 = arith.constant 0.000000e+00 : f32
    %14 = vector.broadcast %cst_5 : f32 to vector<32x128xf32>
    %15 = arith.maximumf %13, %14 : vector<32x128xf32>
    %16 = arith.truncf %15 : vector<32x128xf32> to vector<32x128xbf16>
    %c0_i32_6 = arith.constant 0 : i32
    %17 = tpu.memref_slice %arg15[%c0_i32_6] : memref<4x!tpu.dma_semaphore, #tpu.memory_space<semaphore_mem>> -> memref<1x!tpu.dma_semaphore, #tpu.memory_space<semaphore_mem>>
    %18 = tpu.memref_squeeze %17 : memref<1x!tpu.dma_semaphore, #tpu.memory_space<semaphore_mem>> -> memref<!tpu.dma_semaphore, #tpu.memory_space<semaphore_mem>>
    tpu.wait_dma2 semaphore(%18 : memref<!tpu.dma_semaphore, #tpu.memory_space<semaphore_mem>>) src(%arg3 : memref<128x512xbf16, #tpu.memory_space<any>>) dst(%arg11 : memref<128x512xbf16, #tpu.memory_space<vmem>>)
    %c0_7 = arith.constant 0 : index
    %c0_8 = arith.constant 0 : index
    %19 = vector.load %arg11[%c0_7, %c0_8] : memref<128x512xbf16, #tpu.memory_space<vmem>>, vector<128x512xbf16>
    %cst_9 = arith.constant dense<0.000000e+00> : vector<32x512xf32>
    %20 = tpu.matmul %16, %19, %cst_9 {dimension_numbers = #tpu.dot_dimension_numbers<[1], [0], [0], [1], [0, 0, 1, 1], [], []>} : vector<32x128xbf16>, vector<128x512xbf16>, vector<32x512xf32> -> vector<32x512xf32>
    %c0_10 = arith.constant 0 : index
    %c0_11 = arith.constant 0 : index
    %21 = vector.load %arg5[%c0_10, %c0_11] : memref<1x512xf32, #tpu.memory_space<vmem>>, vector<1x512xf32>
    %22 = vector.broadcast %21 : vector<1x512xf32> to vector<32x512xf32>
    %23 = arith.addf %20, %22 : vector<32x512xf32>
    %c1_i32_12 = arith.constant 1 : i32
    %24 = tpu.memref_slice %arg15[%c1_i32_12] : memref<4x!tpu.dma_semaphore, #tpu.memory_space<semaphore_mem>> -> memref<1x!tpu.dma_semaphore, #tpu.memory_space<semaphore_mem>>
    %25 = tpu.memref_squeeze %24 : memref<1x!tpu.dma_semaphore, #tpu.memory_space<semaphore_mem>> -> memref<!tpu.dma_semaphore, #tpu.memory_space<semaphore_mem>>
    tpu.wait_dma2 semaphore(%25 : memref<!tpu.dma_semaphore, #tpu.memory_space<semaphore_mem>>) src(%arg4 : memref<128x512xbf16, #tpu.memory_space<any>>) dst(%arg12 : memref<128x512xbf16, #tpu.memory_space<vmem>>)
    %c0_13 = arith.constant 0 : index
    %c0_14 = arith.constant 0 : index
    %26 = vector.load %arg12[%c0_13, %c0_14] : memref<128x512xbf16, #tpu.memory_space<vmem>>, vector<128x512xbf16>
    %cst_15 = arith.constant 0.000000e+00 : f32
    %27 = vector.broadcast %cst_15 : f32 to vector<8x128xf32>
    %cst_16 = arith.constant 0.000000e+00 : f32
    %28 = vector.broadcast %cst_16 : f32 to vector<8x128xf32>
    %29 = vector.extract_strided_slice %23 {offsets = [0, 0], sizes = [8, 512], strides = [1, 1]} : vector<32x512xf32> to vector<8x512xf32>
    %30 = arith.truncf %27 : vector<8x128xf32> to vector<8x128xbf16>
    %cst_17 = arith.constant dense<0.000000e+00> : vector<8x512xf32>
    %31 = tpu.matmul %30, %26, %cst_17 {dimension_numbers = #tpu.dot_dimension_numbers<[1], [0], [0], [1], [0, 0, 1, 1], [], []>} : vector<8x128xbf16>, vector<128x512xbf16>, vector<8x512xf32> -> vector<8x512xf32>
    %32 = arith.addf %29, %31 : vector<8x512xf32>
    %33 = vector.extract_strided_slice %32 {offsets = [0, 0], sizes = [8, 128], strides = [1, 1]} : vector<8x512xf32> to vector<8x128xf32>
    %34 = arith.negf %33 : vector<8x128xf32>
    %35 = math.exp %34 : vector<8x128xf32>
    %cst_18 = arith.constant 1.000000e+00 : f32
    %36 = vector.broadcast %cst_18 : f32 to vector<8x128xf32>
    %37 = arith.addf %36, %35 : vector<8x128xf32>
    %38 = arith.divf %36, %37 : vector<8x128xf32>
    %39 = vector.extract_strided_slice %32 {offsets = [0, 128], sizes = [8, 128], strides = [1, 1]} : vector<8x512xf32> to vector<8x128xf32>
    %40 = arith.negf %39 : vector<8x128xf32>
    %41 = math.exp %40 : vector<8x128xf32>
    %cst_19 = arith.constant 1.000000e+00 : f32
    %42 = vector.broadcast %cst_19 : f32 to vector<8x128xf32>
    %43 = arith.addf %42, %41 : vector<8x128xf32>
    %44 = arith.divf %42, %43 : vector<8x128xf32>
    %45 = vector.extract_strided_slice %32 {offsets = [0, 256], sizes = [8, 128], strides = [1, 1]} : vector<8x512xf32> to vector<8x128xf32>
    %46 = math.tanh %45 : vector<8x128xf32>
    %47 = vector.extract_strided_slice %32 {offsets = [0, 384], sizes = [8, 128], strides = [1, 1]} : vector<8x512xf32> to vector<8x128xf32>
    %48 = arith.negf %47 : vector<8x128xf32>
    %49 = math.exp %48 : vector<8x128xf32>
    %cst_20 = arith.constant 1.000000e+00 : f32
    %50 = vector.broadcast %cst_20 : f32 to vector<8x128xf32>
    %51 = arith.addf %50, %49 : vector<8x128xf32>
    %52 = arith.divf %50, %51 : vector<8x128xf32>
    %53 = arith.mulf %44, %28 : vector<8x128xf32>
    %54 = arith.mulf %38, %46 : vector<8x128xf32>
    %55 = arith.addf %53, %54 : vector<8x128xf32>
    %56 = math.tanh %55 : vector<8x128xf32>
    %57 = arith.mulf %52, %56 : vector<8x128xf32>
    %58 = vector.extract_strided_slice %23 {offsets = [8, 0], sizes = [8, 512], strides = [1, 1]} : vector<32x512xf32> to vector<8x512xf32>
    %59 = arith.truncf %57 : vector<8x128xf32> to vector<8x128xbf16>
    %cst_21 = arith.constant dense<0.000000e+00> : vector<8x512xf32>
    %60 = tpu.matmul %59, %26, %cst_21 {dimension_numbers = #tpu.dot_dimension_numbers<[1], [0], [0], [1], [0, 0, 1, 1], [], []>} : vector<8x128xbf16>, vector<128x512xbf16>, vector<8x512xf32> -> vector<8x512xf32>
    %61 = arith.addf %58, %60 : vector<8x512xf32>
    %62 = vector.extract_strided_slice %61 {offsets = [0, 0], sizes = [8, 128], strides = [1, 1]} : vector<8x512xf32> to vector<8x128xf32>
    %63 = arith.negf %62 : vector<8x128xf32>
    %64 = math.exp %63 : vector<8x128xf32>
    %cst_22 = arith.constant 1.000000e+00 : f32
    %65 = vector.broadcast %cst_22 : f32 to vector<8x128xf32>
    %66 = arith.addf %65, %64 : vector<8x128xf32>
    %67 = arith.divf %65, %66 : vector<8x128xf32>
    %68 = vector.extract_strided_slice %61 {offsets = [0, 128], sizes = [8, 128], strides = [1, 1]} : vector<8x512xf32> to vector<8x128xf32>
    %69 = arith.negf %68 : vector<8x128xf32>
    %70 = math.exp %69 : vector<8x128xf32>
    %cst_23 = arith.constant 1.000000e+00 : f32
    %71 = vector.broadcast %cst_23 : f32 to vector<8x128xf32>
    %72 = arith.addf %71, %70 : vector<8x128xf32>
    %73 = arith.divf %71, %72 : vector<8x128xf32>
    %74 = vector.extract_strided_slice %61 {offsets = [0, 256], sizes = [8, 128], strides = [1, 1]} : vector<8x512xf32> to vector<8x128xf32>
    %75 = math.tanh %74 : vector<8x128xf32>
    %76 = vector.extract_strided_slice %61 {offsets = [0, 384], sizes = [8, 128], strides = [1, 1]} : vector<8x512xf32> to vector<8x128xf32>
    %77 = arith.negf %76 : vector<8x128xf32>
    %78 = math.exp %77 : vector<8x128xf32>
    %cst_24 = arith.constant 1.000000e+00 : f32
    %79 = vector.broadcast %cst_24 : f32 to vector<8x128xf32>
    %80 = arith.addf %79, %78 : vector<8x128xf32>
    %81 = arith.divf %79, %80 : vector<8x128xf32>
    %82 = arith.mulf %73, %55 : vector<8x128xf32>
    %83 = arith.mulf %67, %75 : vector<8x128xf32>
    %84 = arith.addf %82, %83 : vector<8x128xf32>
    %85 = math.tanh %84 : vector<8x128xf32>
    %86 = arith.mulf %81, %85 : vector<8x128xf32>
    %87 = vector.extract_strided_slice %23 {offsets = [16, 0], sizes = [8, 512], strides = [1, 1]} : vector<32x512xf32> to vector<8x512xf32>
    %88 = arith.truncf %86 : vector<8x128xf32> to vector<8x128xbf16>
    %cst_25 = arith.constant dense<0.000000e+00> : vector<8x512xf32>
    %89 = tpu.matmul %88, %26, %cst_25 {dimension_numbers = #tpu.dot_dimension_numbers<[1], [0], [0], [1], [0, 0, 1, 1], [], []>} : vector<8x128xbf16>, vector<128x512xbf16>, vector<8x512xf32> -> vector<8x512xf32>
    %90 = arith.addf %87, %89 : vector<8x512xf32>
    %91 = vector.extract_strided_slice %90 {offsets = [0, 0], sizes = [8, 128], strides = [1, 1]} : vector<8x512xf32> to vector<8x128xf32>
    %92 = arith.negf %91 : vector<8x128xf32>
    %93 = math.exp %92 : vector<8x128xf32>
    %cst_26 = arith.constant 1.000000e+00 : f32
    %94 = vector.broadcast %cst_26 : f32 to vector<8x128xf32>
    %95 = arith.addf %94, %93 : vector<8x128xf32>
    %96 = arith.divf %94, %95 : vector<8x128xf32>
    %97 = vector.extract_strided_slice %90 {offsets = [0, 128], sizes = [8, 128], strides = [1, 1]} : vector<8x512xf32> to vector<8x128xf32>
    %98 = arith.negf %97 : vector<8x128xf32>
    %99 = math.exp %98 : vector<8x128xf32>
    %cst_27 = arith.constant 1.000000e+00 : f32
    %100 = vector.broadcast %cst_27 : f32 to vector<8x128xf32>
    %101 = arith.addf %100, %99 : vector<8x128xf32>
    %102 = arith.divf %100, %101 : vector<8x128xf32>
    %103 = vector.extract_strided_slice %90 {offsets = [0, 256], sizes = [8, 128], strides = [1, 1]} : vector<8x512xf32> to vector<8x128xf32>
    %104 = math.tanh %103 : vector<8x128xf32>
    %105 = vector.extract_strided_slice %90 {offsets = [0, 384], sizes = [8, 128], strides = [1, 1]} : vector<8x512xf32> to vector<8x128xf32>
    %106 = arith.negf %105 : vector<8x128xf32>
    %107 = math.exp %106 : vector<8x128xf32>
    %cst_28 = arith.constant 1.000000e+00 : f32
    %108 = vector.broadcast %cst_28 : f32 to vector<8x128xf32>
    %109 = arith.addf %108, %107 : vector<8x128xf32>
    %110 = arith.divf %108, %109 : vector<8x128xf32>
    %111 = arith.mulf %102, %84 : vector<8x128xf32>
    %112 = arith.mulf %96, %104 : vector<8x128xf32>
    %113 = arith.addf %111, %112 : vector<8x128xf32>
    %114 = math.tanh %113 : vector<8x128xf32>
    %115 = arith.mulf %110, %114 : vector<8x128xf32>
    %116 = vector.extract_strided_slice %23 {offsets = [24, 0], sizes = [8, 512], strides = [1, 1]} : vector<32x512xf32> to vector<8x512xf32>
    %117 = arith.truncf %115 : vector<8x128xf32> to vector<8x128xbf16>
    %cst_29 = arith.constant dense<0.000000e+00> : vector<8x512xf32>
    %118 = tpu.matmul %117, %26, %cst_29 {dimension_numbers = #tpu.dot_dimension_numbers<[1], [0], [0], [1], [0, 0, 1, 1], [], []>} : vector<8x128xbf16>, vector<128x512xbf16>, vector<8x512xf32> -> vector<8x512xf32>
    %119 = arith.addf %116, %118 : vector<8x512xf32>
    %120 = vector.extract_strided_slice %119 {offsets = [0, 0], sizes = [8, 128], strides = [1, 1]} : vector<8x512xf32> to vector<8x128xf32>
    %121 = arith.negf %120 : vector<8x128xf32>
    %122 = math.exp %121 : vector<8x128xf32>
    %cst_30 = arith.constant 1.000000e+00 : f32
    %123 = vector.broadcast %cst_30 : f32 to vector<8x128xf32>
    %124 = arith.addf %123, %122 : vector<8x128xf32>
    %125 = arith.divf %123, %124 : vector<8x128xf32>
    %126 = vector.extract_strided_slice %119 {offsets = [0, 128], sizes = [8, 128], strides = [1, 1]} : vector<8x512xf32> to vector<8x128xf32>
    %127 = arith.negf %126 : vector<8x128xf32>
    %128 = math.exp %127 : vector<8x128xf32>
    %cst_31 = arith.constant 1.000000e+00 : f32
    %129 = vector.broadcast %cst_31 : f32 to vector<8x128xf32>
    %130 = arith.addf %129, %128 : vector<8x128xf32>
    %131 = arith.divf %129, %130 : vector<8x128xf32>
    %132 = vector.extract_strided_slice %119 {offsets = [0, 256], sizes = [8, 128], strides = [1, 1]} : vector<8x512xf32> to vector<8x128xf32>
    %133 = math.tanh %132 : vector<8x128xf32>
    %134 = vector.extract_strided_slice %119 {offsets = [0, 384], sizes = [8, 128], strides = [1, 1]} : vector<8x512xf32> to vector<8x128xf32>
    %135 = arith.negf %134 : vector<8x128xf32>
    %136 = math.exp %135 : vector<8x128xf32>
    %cst_32 = arith.constant 1.000000e+00 : f32
    %137 = vector.broadcast %cst_32 : f32 to vector<8x128xf32>
    %138 = arith.addf %137, %136 : vector<8x128xf32>
    %139 = arith.divf %137, %138 : vector<8x128xf32>
    %140 = arith.mulf %131, %113 : vector<8x128xf32>
    %141 = arith.mulf %125, %133 : vector<8x128xf32>
    %142 = arith.addf %140, %141 : vector<8x128xf32>
    %143 = math.tanh %142 : vector<8x128xf32>
    %144 = arith.mulf %139, %143 : vector<8x128xf32>
    %145 = tpu.concatenate %57, %86, %115, %144 in 0 : vector<8x128xf32>, vector<8x128xf32>, vector<8x128xf32>, vector<8x128xf32> -> vector<32x128xf32>
    %146 = arith.truncf %145 : vector<32x128xf32> to vector<32x128xbf16>
    %c2_i32_33 = arith.constant 2 : i32
    %147 = tpu.memref_slice %arg15[%c2_i32_33] : memref<4x!tpu.dma_semaphore, #tpu.memory_space<semaphore_mem>> -> memref<1x!tpu.dma_semaphore, #tpu.memory_space<semaphore_mem>>
    %148 = tpu.memref_squeeze %147 : memref<1x!tpu.dma_semaphore, #tpu.memory_space<semaphore_mem>> -> memref<!tpu.dma_semaphore, #tpu.memory_space<semaphore_mem>>
    tpu.wait_dma2 semaphore(%148 : memref<!tpu.dma_semaphore, #tpu.memory_space<semaphore_mem>>) src(%arg6 : memref<128x128xbf16, #tpu.memory_space<any>>) dst(%arg13 : memref<128x128xbf16, #tpu.memory_space<vmem>>)
    %c0_34 = arith.constant 0 : index
    %c0_35 = arith.constant 0 : index
    %149 = vector.load %arg13[%c0_34, %c0_35] : memref<128x128xbf16, #tpu.memory_space<vmem>>, vector<128x128xbf16>
    %cst_36 = arith.constant dense<0.000000e+00> : vector<32x128xf32>
    %150 = tpu.matmul %146, %149, %cst_36 {dimension_numbers = #tpu.dot_dimension_numbers<[1], [0], [0], [1], [0, 0, 1, 1], [], []>} : vector<32x128xbf16>, vector<128x128xbf16>, vector<32x128xf32> -> vector<32x128xf32>
    %c0_37 = arith.constant 0 : index
    %c0_38 = arith.constant 0 : index
    %151 = vector.load %arg7[%c0_37, %c0_38] : memref<1x128xf32, #tpu.memory_space<vmem>>, vector<1x128xf32>
    %152 = vector.broadcast %151 : vector<1x128xf32> to vector<32x128xf32>
    %153 = arith.addf %150, %152 : vector<32x128xf32>
    %cst_39 = arith.constant 0.000000e+00 : f32
    %154 = vector.broadcast %cst_39 : f32 to vector<32x128xf32>
    %155 = arith.maximumf %153, %154 : vector<32x128xf32>
    %156 = arith.truncf %155 : vector<32x128xf32> to vector<32x128xbf16>
    %c3_i32_40 = arith.constant 3 : i32
    %157 = tpu.memref_slice %arg15[%c3_i32_40] : memref<4x!tpu.dma_semaphore, #tpu.memory_space<semaphore_mem>> -> memref<1x!tpu.dma_semaphore, #tpu.memory_space<semaphore_mem>>
    %158 = tpu.memref_squeeze %157 : memref<1x!tpu.dma_semaphore, #tpu.memory_space<semaphore_mem>> -> memref<!tpu.dma_semaphore, #tpu.memory_space<semaphore_mem>>
    tpu.wait_dma2 semaphore(%158 : memref<!tpu.dma_semaphore, #tpu.memory_space<semaphore_mem>>) src(%arg8 : memref<128x128xbf16, #tpu.memory_space<any>>) dst(%arg14 : memref<128x128xbf16, #tpu.memory_space<vmem>>)
    %c0_41 = arith.constant 0 : index
    %c0_42 = arith.constant 0 : index
    %159 = vector.load %arg14[%c0_41, %c0_42] : memref<128x128xbf16, #tpu.memory_space<vmem>>, vector<128x128xbf16>
    %cst_43 = arith.constant dense<0.000000e+00> : vector<32x128xf32>
    %160 = tpu.matmul %156, %159, %cst_43 {dimension_numbers = #tpu.dot_dimension_numbers<[1], [0], [0], [1], [0, 0, 1, 1], [], []>} : vector<32x128xbf16>, vector<128x128xbf16>, vector<32x128xf32> -> vector<32x128xf32>
    %c0_44 = arith.constant 0 : index
    %c0_45 = arith.constant 0 : index
    %161 = vector.load %arg9[%c0_44, %c0_45] : memref<1x128xf32, #tpu.memory_space<vmem>>, vector<1x128xf32>
    %162 = vector.broadcast %161 : vector<1x128xf32> to vector<32x128xf32>
    %163 = arith.addf %160, %162 : vector<32x128xf32>
    %c0_46 = arith.constant 0 : index
    %c0_47 = arith.constant 0 : index
    %164 = vector.load %arg10[%c0_46, %c0_47] : memref<32x128xf32, #tpu.memory_space<vmem>>, vector<32x128xf32>
    tpu.vector_store %arg10[%c0_46, %c0_47], %163 {strides = array<i32>} : memref<32x128xf32, #tpu.memory_space<vmem>>, vector<32x128xf32>,
    return
  }
}

</mosaic_0001>

<llo_original>
// kernel: kinematic_lstm_forward.1
$region0: #{kinematic_lstm_forward.1}
  #allocation0 [shape = 'u32[]', space=smem, size = 0x4, offset = 0x4, fixed_abs, tag = 'smem constant byte address 0x4 - core index']
  #allocation1 [shape = 'u32[72,128]{1,0:T(1,128)}', space=vmem, size = 0x9000, scoped, tag = 'internal scratch']
  #allocation2 [shape = 'bf16[128,512]{1,0:T(8,128)(2,1)}', space=vmem, size = 0x20000, scoped, tag = 'scratch operand']
  #allocation3 [shape = 'bf16[128,512]{1,0:T(8,128)(2,1)}', space=vmem, size = 0x20000, scoped, tag = 'scratch operand']
  #allocation4 [shape = 'bf16[128,128]{1,0:T(8,128)(2,1)}', space=vmem, size = 0x8000, scoped, tag = 'scratch operand']
  #allocation5 [shape = 'bf16[128,128]{1,0:T(8,128)(2,1)}', space=vmem, size = 0x8000, scoped, tag = 'scratch operand']
  #allocation6 [shape = 's32[4]{0}', space=sflag, size = 0x10, scoped, tag = 'scratch operand']
  #allocation14 [shape = 's32[]', space=sflag, size = 0x4, offset = 0, fixed_abs, tag = 'sflag constant byte address 0x0 - dummy sync flag']
  #allocation15 [shape = 's32[]', space=sflag, size = 0x4, offset = 0, fixed_abs, tag = 'sflag constant byte address 0x0 - dummy sync flag']
  #allocation16 [shape = 's32[]', space=sflag, size = 0x4, offset = 0, fixed_abs, tag = 'sflag constant byte address 0x0 - dummy sync flag']
  #allocation17 [shape = 's32[]', space=sflag, size = 0x4, offset = 0, fixed_abs, tag = 'sflag constant byte address 0x0 - dummy sync flag']
  #allocation18 [shape = 's32[]', space=sflag, size = 0x4, offset = 0, fixed_abs, tag = 'sflag constant byte address 0x0 - dummy sync flag']
  #allocation19 [shape = 'u32[]', space=smem, size = 0x4, offset = 0x44, fixed_abs, tag = 'smem constant byte address 0x44 - assertion arg 0']
  #allocation20 [shape = 'u32[]', space=smem, size = 0x4, offset = 0x48, fixed_abs, tag = 'smem constant byte address 0x48 - assertion arg 1']
  %s0 = inlined_call_operand.vmem [shape: bf16[32,768], index: 0, kind: input, shape index: {}]
  %s1 = inlined_call_operand.vmem [shape: bf16[768,128], index: 1, kind: input, shape index: {}]
  %s2 = inlined_call_operand.hbm [shape: f32[1,128], index: 2, kind: input, shape index: {}]
  %s3 = inlined_call_operand.vmem [shape: bf16[128,512], index: 3, kind: input, shape index: {}]
  %s4 = inlined_call_operand.vmem [shape: bf16[128,512], index: 4, kind: input, shape index: {}]
  %s5 = inlined_call_operand.hbm [shape: f32[1,512], index: 5, kind: input, shape index: {}]
  %s6 = inlined_call_operand.vmem [shape: bf16[128,128], index: 6, kind: input, shape index: {}]
  %s7 = inlined_call_operand.hbm [shape: f32[1,128], index: 7, kind: input, shape index: {}]
  %s8 = inlined_call_operand.hbm [shape: bf16[128,128], index: 8, kind: input, shape index: {}]
  %s9 = inlined_call_operand.hbm [shape: f32[1,128], index: 9, kind: input, shape index: {}]
  %s10 = inlined_call_operand.vmem [shape: f32[32,128], index: 10, kind: output, shape index: {}]
  %s11 = sld [smem:[#allocation0]]
  $region111: #{kinematic_lstm_forward.1} parent=0
    _
  %s13 = ssub.s32 1, %s11
  %s14 = scalar_select 0, %s13, %s11
  $region1: #{kinematic_lstm_forward.1} parent=0
    #allocation7 [shape = 'u8[512]{0}', space=vmem, size = 0x400, scoped, tag = 'input window, operand 2, single buffered']
    #allocation8 [shape = 's32[1]{0}', space=sflag, size = 0x4, scoped, tag = 'scoped memory for kinematic_lstm_forward.1']
    #allocation9 [shape = 'u8[2048]{0}', space=vmem, size = 0x800, scoped, tag = 'input window, operand 5, single buffered']
    #allocation10 [shape = 's32[1]{0}', space=sflag, size = 0x4, scoped, tag = 'scoped memory for kinematic_lstm_forward.1']
    #allocation11 [shape = 'u8[512]{0}', space=vmem, size = 0x400, scoped, tag = 'input window, operand 7, single buffered']
    #allocation12 [shape = 'u8[512]{0}', space=vmem, size = 0x400, scoped, tag = 'input window, operand 9, single buffered']
    #allocation13 [shape = 's32[1]{0}', space=sflag, size = 0x4, scoped, tag = 'scoped memory for kinematic_lstm_forward.1']
    %15 = vsyncpa [#allocation8], 0
    %16 = vsyncpa [#allocation10], 0
    %17 = vsyncpa [#allocation13], 0
    // Predicated region
    $region2: #{kinematic_lstm_forward.1} parent=1 // pred_check
      _
    $region3: #{kinematic_lstm_forward.1} parent=1 // pred_check_branch
      %19 = sbr.rel (0) target = $region5
    $region4: #{kinematic_lstm_forward.1} parent=1 // pred_region
      _
    $region5: #{kinematic_lstm_forward.1} parent=1 // pred_fallthru
      _
    // Predicated region
    $region6: #{kinematic_lstm_forward.1} parent=1 // pred_check
      _
    $region7: #{kinematic_lstm_forward.1} parent=1 // pred_check_branch
      %21 = sbr.rel (0) target = $region9
    $region8: #{kinematic_lstm_forward.1} parent=1 // pred_region
      _
    $region9: #{kinematic_lstm_forward.1} parent=1 // pred_fallthru
      _
    // Predicated region
    $region10: #{kinematic_lstm_forward.1} parent=1 // pred_check
      _
    $region11: #{kinematic_lstm_forward.1} parent=1 // pred_check_branch
      %23 = sbr.rel (0) target = $region13
    $region12: #{kinematic_lstm_forward.1} parent=1 // pred_region
      %25 = vsyncadd [#allocation8], 0
      %s27 = sshll.u32 %s2, 4
      %s28 = int_to_ptr.hbm [resolvable:$true] %s27
      %s29 = sshll.u32 [#allocation7], 4
      %s30 = int_to_ptr.vmem [resolvable:$true] %s29
      %32 = dma.hbm_to_vmem [thread:$0]  %s28, 16, %s30, [#allocation8]
    $region13: #{kinematic_lstm_forward.1} parent=1 // pred_fallthru
      _
    // Predicated region
    $region14: #{kinematic_lstm_forward.1} parent=1 // pred_check
      _
    $region15: #{kinematic_lstm_forward.1} parent=1 // pred_check_branch
      %34 = sbr.rel (0) target = $region17
    $region16: #{kinematic_lstm_forward.1} parent=1 // pred_region
      %36 = vsyncadd [#allocation10], 0
      %s38 = sshll.u32 %s5, 4
      %s39 = int_to_ptr.hbm [resolvable:$true] %s38
      %s40 = sshll.u32 [#allocation9], 4
      %s41 = int_to_ptr.vmem [resolvable:$true] %s40
      %43 = dma.hbm_to_vmem [thread:$0]  %s39, 64, %s41, [#allocation10]
    $region17: #{kinematic_lstm_forward.1} parent=1 // pred_fallthru
      _
    // Predicated region
    $region18: #{kinematic_lstm_forward.1} parent=1 // pred_check
      _
    $region19: #{kinematic_lstm_forward.1} parent=1 // pred_check_branch
      %45 = sbr.rel (0) target = $region21
    $region20: #{kinematic_lstm_forward.1} parent=1 // pred_region
      %47 = vsyncadd [#allocation10], 0
      %s49 = sshll.u32 %s7, 4
      %s50 = int_to_ptr.hbm [resolvable:$true] %s49
      %s51 = sshll.u32 [#allocation11], 4
      %s52 = int_to_ptr.vmem [resolvable:$true] %s51
      %54 = dma.hbm_to_vmem [thread:$0]  %s50, 16, %s52, [#allocation10]
    $region21: #{kinematic_lstm_forward.1} parent=1 // pred_fallthru
      _
    // Predicated region
    $region22: #{kinematic_lstm_forward.1} parent=1 // pred_check
      _
    $region23: #{kinematic_lstm_forward.1} parent=1 // pred_check_branch
      %56 = sbr.rel (0) target = $region25
    $region24: #{kinematic_lstm_forward.1} parent=1 // pred_region
      %58 = vsyncadd [#allocation13], 0
      %s60 = sshll.u32 %s9, 4
      %s61 = int_to_ptr.hbm [resolvable:$true] %s60
      %s62 = sshll.u32 [#allocation12], 4
      %s63 = int_to_ptr.vmem [resolvable:$true] %s62
      %65 = dma.hbm_to_vmem [thread:$0]  %s61, 16, %s63, [#allocation13]
    $region25: #{kinematic_lstm_forward.1} parent=1 // pred_fallthru
      _
    // Predicated region
    $region26: #{kinematic_lstm_forward.1} parent=1 // pred_check
      _
    $region27: #{kinematic_lstm_forward.1} parent=1 // pred_check_branch
      %67 = sbr.rel (0) target = $region29
    $region28: #{kinematic_lstm_forward.1} parent=1 // pred_region
      %69 = dma.done [#allocation8], 16
    $region29: #{kinematic_lstm_forward.1} parent=1 // pred_fallthru
      _
    // Predicated region
    $region30: #{kinematic_lstm_forward.1} parent=1 // pred_check
      _
    $region31: #{kinematic_lstm_forward.1} parent=1 // pred_check_branch
      %71 = sbr.rel (0) target = $region33
    $region32: #{kinematic_lstm_forward.1} parent=1 // pred_region
      %73 = dma.done [#allocation10], 64
    $region33: #{kinematic_lstm_forward.1} parent=1 // pred_fallthru
      _
    // Predicated region
    $region34: #{kinematic_lstm_forward.1} parent=1 // pred_check
      _
    $region35: #{kinematic_lstm_forward.1} parent=1 // pred_check_branch
      %75 = sbr.rel (0) target = $region37
    $region36: #{kinematic_lstm_forward.1} parent=1 // pred_region
      %77 = dma.done [#allocation10], 16
    $region37: #{kinematic_lstm_forward.1} parent=1 // pred_fallthru
      _
    // Predicated region
    $region38: #{kinematic_lstm_forward.1} parent=1 // pred_check
      _
    $region39: #{kinematic_lstm_forward.1} parent=1 // pred_check_branch
      %79 = sbr.rel (0) target = $region41
    $region40: #{kinematic_lstm_forward.1} parent=1 // pred_region
      %81 = dma.done [#allocation13], 16
    $region41: #{kinematic_lstm_forward.1} parent=1 // pred_fallthru
      _
    // Predicated region
    $region42: #{kinematic_lstm_forward.1} parent=1 // pred_check
      _
    $region43: #{kinematic_lstm_forward.1} parent=1 // pred_check_branch
      %84 = sbr.rel (0) target = $region45
    $region44: #{kinematic_lstm_forward.1} parent=1 // pred_region
      loop: start=0, step=1, limit=1
      $region46: #{kinematic_lstm_forward.1} parent=44 // loop_pre_header
        _
      $region47: #{kinematic_lstm_forward.1} parent=44 // loop_header
        %s86 = sphi 0, %s90
        %p87 = scmp.ge.s32.totalorder %s86, 1
        %s91 = sphi %s3, %s3
        %s92 = sphi [#allocation2], [#allocation2]
      $region48: #{kinematic_lstm_forward.1} parent=44 // loop_header_branch
        %89 = sbr.rel (%p87) target = $region52
      $region49: #{kinematic_lstm_forward.1} parent=44 // loop_body
        %v93 = vld [vmem:[%s91] sm:$0xff]
        %94 = vst [vmem:[%s92] sm:$0xff] %v93
        %v95 = vld [vmem:[%s91 + $0x8] sm:$0xff]
        %96 = vst [vmem:[%s92 + $0x8] sm:$0xff] %v95
        %v97 = vld [vmem:[%s91 + $0x10] sm:$0xff]
        %98 = vst [vmem:[%s92 + $0x10] sm:$0xff] %v97
        %v99 = vld [vmem:[%s91 + $0x18] sm:$0xff]
        %100 = vst [vmem:[%s92 + $0x18] sm:$0xff] %v99
        %v101 = vld [vmem:[%s91 + $0x20] sm:$0xff]
        %102 = vst [vmem:[%s92 + $0x20] sm:$0xff] %v101
        %v103 = vld [vmem:[%s91 + $0x28] sm:$0xff]
        %104 = vst [vmem:[%s92 + $0x28] sm:$0xff] %v103
        %v105 = vld [vmem:[%s91 + $0x30] sm:$0xff]
        %106 = vst [vmem:[%s92 + $0x30] sm:$0xff] %v105
        %v107 = vld [vmem:[%s91 + $0x38] sm:$0xff]
        %108 = vst [vmem:[%s92 + $0x38] sm:$0xff] %v107
        %v109 = vld [vmem:[%s91 + $0x40] sm:$0xff]
        %110 = vst [vmem:[%s92 + $0x40] sm:$0xff] %v109
        %v111 = vld [vmem:[%s91 + $0x48] sm:$0xff]
        %112 = vst [vmem:[%s92 + $0x48] sm:$0xff] %v111
        %v113 = vld [vmem:[%s91 + $0x50] sm:$0xff]
        %114 = vst [vmem:[%s92 + $0x50] sm:$0xff] %v113
        %v115 = vld [vmem:[%s91 + $0x58] sm:$0xff]
        %116 = vst [vmem:[%s92 + $0x58] sm:$0xff] %v115
        %v117 = vld [vmem:[%s91 + $0x60] sm:$0xff]
        %118 = vst [vmem:[%s92 + $0x60] sm:$0xff] %v117
        %v119 = vld [vmem:[%s91 + $0x68] sm:$0xff]
        %120 = vst [vmem:[%s92 + $0x68] sm:$0xff] %v119
        %v121 = vld [vmem:[%s91 + $0x70] sm:$0xff]
        %122 = vst [vmem:[%s92 + $0x70] sm:$0xff] %v121
        %v123 = vld [vmem:[%s91 + $0x78] sm:$0xff]
        %124 = vst [vmem:[%s92 + $0x78] sm:$0xff] %v123
        %v125 = vld [vmem:[%s91 + $0x80] sm:$0xff]
        %126 = vst [vmem:[%s92 + $0x80] sm:$0xff] %v125
        %v127 = vld [vmem:[%s91 + $0x88] sm:$0xff]
        %128 = vst [vmem:[%s92 + $0x88] sm:$0xff] %v127
        %v129 = vld [vmem:[%s91 + $0x90] sm:$0xff]
        %130 = vst [vmem:[%s92 + $0x90] sm:$0xff] %v129
        %v131 = vld [vmem:[%s91 + $0x98] sm:$0xff]
        %132 = vst [vmem:[%s92 + $0x98] sm:$0xff] %v131
        %v133 = vld [vmem:[%s91 + $0xa0] sm:$0xff]
        %134 = vst [vmem:[%s92 + $0xa0] sm:$0xff] %v133
        %v135 = vld [vmem:[%s91 + $0xa8] sm:$0xff]
        %136 = vst [vmem:[%s92 + $0xa8] sm:$0xff] %v135
        %v137 = vld [vmem:[%s91 + $0xb0] sm:$0xff]
        %138 = vst [vmem:[%s92 + $0xb0] sm:$0xff] %v137
        %v139 = vld [vmem:[%s91 + $0xb8] sm:$0xff]
        %140 = vst [vmem:[%s92 + $0xb8] sm:$0xff] %v139
        %v141 = vld [vmem:[%s91 + $0xc0] sm:$0xff]
        %142 = vst [vmem:[%s92 + $0xc0] sm:$0xff] %v141
        %v143 = vld [vmem:[%s91 + $0xc8] sm:$0xff]
        %144 = vst [vmem:[%s92 + $0xc8] sm:$0xff] %v143
        %v145 = vld [vmem:[%s91 + $0xd0] sm:$0xff]
        %146 = vst [vmem:[%s92 + $0xd0] sm:$0xff] %v145
        %v147 = vld [vmem:[%s91 + $0xd8] sm:$0xff]
        %148 = vst [vmem:[%s92 + $0xd8] sm:$0xff] %v147
        %v149 = vld [vmem:[%s91 + $0xe0] sm:$0xff]
        %150 = vst [vmem:[%s92 + $0xe0] sm:$0xff] %v149
        %v151 = vld [vmem:[%s91 + $0xe8] sm:$0xff]
        %152 = vst [vmem:[%s92 + $0xe8] sm:$0xff] %v151
        %v153 = vld [vmem:[%s91 + $0xf0] sm:$0xff]
        %154 = vst [vmem:[%s92 + $0xf0] sm:$0xff] %v153
        %v155 = vld [vmem:[%s91 + $0xf8] sm:$0xff]
        %156 = vst [vmem:[%s92 + $0xf8] sm:$0xff] %v155
      $region50: #{kinematic_lstm_forward.1} parent=44 // loop_footer
        %s90 = sadd.s32 1, %s86
      $region51: #{kinematic_lstm_forward.1} parent=44 // loop_footer_branch
        %85 = sbr.rel target = $region47
      $region52: #{kinematic_lstm_forward.1} parent=44 // loop_exit
        _
    $region45: #{kinematic_lstm_forward.1} parent=1 // pred_fallthru
      _
    // Predicated region
    $region53: #{kinematic_lstm_forward.1} parent=1 // pred_check
      _
    $region54: #{kinematic_lstm_forward.1} parent=1 // pred_check_branch
      %158 = sbr.rel target = $region56
    $region55: #{kinematic_lstm_forward.1} parent=1 // pred_region
      _
    $region56: #{kinematic_lstm_forward.1} parent=1 // pred_fallthru
      _
    // Predicated region
    $region57: #{kinematic_lstm_forward.1} parent=1 // pred_check
      _
    $region58: #{kinematic_lstm_forward.1} parent=1 // pred_check_branch
      %161 = sbr.rel (0) target = $region60
    $region59: #{kinematic_lstm_forward.1} parent=1 // pred_region
      %162 = vsyncadd [#allocation6], 4096
    $region60: #{kinematic_lstm_forward.1} parent=1 // pred_fallthru
      _
    %s163 = scalar_lea.sflag [#allocation6], 1
    // Predicated region
    $region61: #{kinematic_lstm_forward.1} parent=1 // pred_check
      _
    $region62: #{kinematic_lstm_forward.1} parent=1 // pred_check_branch
      %165 = sbr.rel (0) target = $region64
    $region63: #{kinematic_lstm_forward.1} parent=1 // pred_region
      loop: start=0, step=1, limit=1
      $region65: #{kinematic_lstm_forward.1} parent=63 // loop_pre_header
        _
      $region66: #{kinematic_lstm_forward.1} parent=63 // loop_header
        %s167 = sphi 0, %s171
        %p168 = scmp.ge.s32.totalorder %s167, 1
        %s172 = sphi %s4, %s4
        %s173 = sphi [#allocation3], [#allocation3]
      $region67: #{kinematic_lstm_forward.1} parent=63 // loop_header_branch
        %170 = sbr.rel (%p168) target = $region71
      $region68: #{kinematic_lstm_forward.1} parent=63 // loop_body
        %v174 = vld [vmem:[%s172] sm:$0xff]
        %175 = vst [vmem:[%s173] sm:$0xff] %v174
        %v176 = vld [vmem:[%s172 + $0x8] sm:$0xff]
        %177 = vst [vmem:[%s173 + $0x8] sm:$0xff] %v176
        %v178 = vld [vmem:[%s172 + $0x10] sm:$0xff]
        %179 = vst [vmem:[%s173 + $0x10] sm:$0xff] %v178
        %v180 = vld [vmem:[%s172 + $0x18] sm:$0xff]
        %181 = vst [vmem:[%s173 + $0x18] sm:$0xff] %v180
        %v182 = vld [vmem:[%s172 + $0x20] sm:$0xff]
        %183 = vst [vmem:[%s173 + $0x20] sm:$0xff] %v182
        %v184 = vld [vmem:[%s172 + $0x28] sm:$0xff]
        %185 = vst [vmem:[%s173 + $0x28] sm:$0xff] %v184
        %v186 = vld [vmem:[%s172 + $0x30] sm:$0xff]
        %187 = vst [vmem:[%s173 + $0x30] sm:$0xff] %v186
        %v188 = vld [vmem:[%s172 + $0x38] sm:$0xff]
        %189 = vst [vmem:[%s173 + $0x38] sm:$0xff] %v188
        %v190 = vld [vmem:[%s172 + $0x40] sm:$0xff]
        %191 = vst [vmem:[%s173 + $0x40] sm:$0xff] %v190
        %v192 = vld [vmem:[%s172 + $0x48] sm:$0xff]
        %193 = vst [vmem:[%s173 + $0x48] sm:$0xff] %v192
        %v194 = vld [vmem:[%s172 + $0x50] sm:$0xff]
        %195 = vst [vmem:[%s173 + $0x50] sm:$0xff] %v194
        %v196 = vld [vmem:[%s172 + $0x58] sm:$0xff]
        %197 = vst [vmem:[%s173 + $0x58] sm:$0xff] %v196
        %v198 = vld [vmem:[%s172 + $0x60] sm:$0xff]
        %199 = vst [vmem:[%s173 + $0x60] sm:$0xff] %v198
        %v200 = vld [vmem:[%s172 + $0x68] sm:$0xff]
        %201 = vst [vmem:[%s173 + $0x68] sm:$0xff] %v200
        %v202 = vld [vmem:[%s172 + $0x70] sm:$0xff]
        %203 = vst [vmem:[%s173 + $0x70] sm:$0xff] %v202
        %v204 = vld [vmem:[%s172 + $0x78] sm:$0xff]
        %205 = vst [vmem:[%s173 + $0x78] sm:$0xff] %v204
        %v206 = vld [vmem:[%s172 + $0x80] sm:$0xff]
        %207 = vst [vmem:[%s173 + $0x80] sm:$0xff] %v206
        %v208 = vld [vmem:[%s172 + $0x88] sm:$0xff]
        %209 = vst [vmem:[%s173 + $0x88] sm:$0xff] %v208
        %v210 = vld [vmem:[%s172 + $0x90] sm:$0xff]
        %211 = vst [vmem:[%s173 + $0x90] sm:$0xff] %v210
        %v212 = vld [vmem:[%s172 + $0x98] sm:$0xff]
        %213 = vst [vmem:[%s173 + $0x98] sm:$0xff] %v212
        %v214 = vld [vmem:[%s172 + $0xa0] sm:$0xff]
        %215 = vst [vmem:[%s173 + $0xa0] sm:$0xff] %v214
        %v216 = vld [vmem:[%s172 + $0xa8] sm:$0xff]
        %217 = vst [vmem:[%s173 + $0xa8] sm:$0xff] %v216
        %v218 = vld [vmem:[%s172 + $0xb0] sm:$0xff]
        %219 = vst [vmem:[%s173 + $0xb0] sm:$0xff] %v218
        %v220 = vld [vmem:[%s172 + $0xb8] sm:$0xff]
        %221 = vst [vmem:[%s173 + $0xb8] sm:$0xff] %v220
        %v222 = vld [vmem:[%s172 + $0xc0] sm:$0xff]
        %223 = vst [vmem:[%s173 + $0xc0] sm:$0xff] %v222
        %v224 = vld [vmem:[%s172 + $0xc8] sm:$0xff]
        %225 = vst [vmem:[%s173 + $0xc8] sm:$0xff] %v224
        %v226 = vld [vmem:[%s172 + $0xd0] sm:$0xff]
        %227 = vst [vmem:[%s173 + $0xd0] sm:$0xff] %v226
        %v228 = vld [vmem:[%s172 + $0xd8] sm:$0xff]
        %229 = vst [vmem:[%s173 + $0xd8] sm:$0xff] %v228
        %v230 = vld [vmem:[%s172 + $0xe0] sm:$0xff]
        %231 = vst [vmem:[%s173 + $0xe0] sm:$0xff] %v230
        %v232 = vld [vmem:[%s172 + $0xe8] sm:$0xff]
        %233 = vst [vmem:[%s173 + $0xe8] sm:$0xff] %v232
        %v234 = vld [vmem:[%s172 + $0xf0] sm:$0xff]
        %235 = vst [vmem:[%s173 + $0xf0] sm:$0xff] %v234
        %v236 = vld [vmem:[%s172 + $0xf8] sm:$0xff]
        %237 = vst [vmem:[%s173 + $0xf8] sm:$0xff] %v236
      $region69: #{kinematic_lstm_forward.1} parent=63 // loop_footer
        %s171 = sadd.s32 1, %s167
      $region70: #{kinematic_lstm_forward.1} parent=63 // loop_footer_branch
        %166 = sbr.rel target = $region66
      $region71: #{kinematic_lstm_forward.1} parent=63 // loop_exit
        _
    $region64: #{kinematic_lstm_forward.1} parent=1 // pred_fallthru
      _
    // Predicated region
    $region72: #{kinematic_lstm_forward.1} parent=1 // pred_check
      _
    $region73: #{kinematic_lstm_forward.1} parent=1 // pred_check_branch
      %239 = sbr.rel target = $region75
    $region74: #{kinematic_lstm_forward.1} parent=1 // pred_region
      _
    $region75: #{kinematic_lstm_forward.1} parent=1 // pred_fallthru
      _
    // Predicated region
    $region76: #{kinematic_lstm_forward.1} parent=1 // pred_check
      _
    $region77: #{kinematic_lstm_forward.1} parent=1 // pred_check_branch
      %242 = sbr.rel (0) target = $region79
    $region78: #{kinematic_lstm_forward.1} parent=1 // pred_region
      %243 = vsyncadd %s163, 4096
    $region79: #{kinematic_lstm_forward.1} parent=1 // pred_fallthru
      _
    %s244 = scalar_lea.sflag [#allocation6], 2
    // Predicated region
    $region80: #{kinematic_lstm_forward.1} parent=1 // pred_check
      _
    $region81: #{kinematic_lstm_forward.1} parent=1 // pred_check_branch
      %246 = sbr.rel (0) target = $region83
    $region82: #{kinematic_lstm_forward.1} parent=1 // pred_region
      loop: start=0, step=1, limit=1
      $region84: #{kinematic_lstm_forward.1} parent=82 // loop_pre_header
        _
      $region85: #{kinematic_lstm_forward.1} parent=82 // loop_header
        %s248 = sphi 0, %s252
        %p249 = scmp.ge.s32.totalorder %s248, 1
        %s253 = sphi %s6, %s6
        %s254 = sphi [#allocation4], [#allocation4]
      $region86: #{kinematic_lstm_forward.1} parent=82 // loop_header_branch
        %251 = sbr.rel (%p249) target = $region90
      $region87: #{kinematic_lstm_forward.1} parent=82 // loop_body
        %v255 = vld [vmem:[%s253] sm:$0xff]
        %256 = vst [vmem:[%s254] sm:$0xff] %v255
        %v257 = vld [vmem:[%s253 + $0x8] sm:$0xff]
        %258 = vst [vmem:[%s254 + $0x8] sm:$0xff] %v257
        %v259 = vld [vmem:[%s253 + $0x10] sm:$0xff]
        %260 = vst [vmem:[%s254 + $0x10] sm:$0xff] %v259
        %v261 = vld [vmem:[%s253 + $0x18] sm:$0xff]
        %262 = vst [vmem:[%s254 + $0x18] sm:$0xff] %v261
        %v263 = vld [vmem:[%s253 + $0x20] sm:$0xff]
        %264 = vst [vmem:[%s254 + $0x20] sm:$0xff] %v263
        %v265 = vld [vmem:[%s253 + $0x28] sm:$0xff]
        %266 = vst [vmem:[%s254 + $0x28] sm:$0xff] %v265
        %v267 = vld [vmem:[%s253 + $0x30] sm:$0xff]
        %268 = vst [vmem:[%s254 + $0x30] sm:$0xff] %v267
        %v269 = vld [vmem:[%s253 + $0x38] sm:$0xff]
        %270 = vst [vmem:[%s254 + $0x38] sm:$0xff] %v269
      $region88: #{kinematic_lstm_forward.1} parent=82 // loop_footer
        %s252 = sadd.s32 1, %s248
      $region89: #{kinematic_lstm_forward.1} parent=82 // loop_footer_branch
        %247 = sbr.rel target = $region85
      $region90: #{kinematic_lstm_forward.1} parent=82 // loop_exit
        _
    $region83: #{kinematic_lstm_forward.1} parent=1 // pred_fallthru
      _
    // Predicated region
    $region91: #{kinematic_lstm_forward.1} parent=1 // pred_check
      _
    $region92: #{kinematic_lstm_forward.1} parent=1 // pred_check_branch
      %272 = sbr.rel target = $region94
    $region93: #{kinematic_lstm_forward.1} parent=1 // pred_region
      _
    $region94: #{kinematic_lstm_forward.1} parent=1 // pred_fallthru
      _
    // Predicated region
    $region95: #{kinematic_lstm_forward.1} parent=1 // pred_check
      _
    $region96: #{kinematic_lstm_forward.1} parent=1 // pred_check_branch
      %275 = sbr.rel (0) target = $region98
    $region97: #{kinematic_lstm_forward.1} parent=1 // pred_region
      %276 = vsyncadd %s244, 1024
    $region98: #{kinematic_lstm_forward.1} parent=1 // pred_fallthru
      _
    %s277 = scalar_lea.sflag [#allocation6], 3
    // Predicated region
    $region99: #{kinematic_lstm_forward.1} parent=1 // pred_check
      _
    $region100: #{kinematic_lstm_forward.1} parent=1 // pred_check_branch
      %279 = sbr.rel target = $region102
    $region101: #{kinematic_lstm_forward.1} parent=1 // pred_region
      %280 = sst [smem:[#allocation19]] [#allocation18]
      %281 = sst [smem:[#allocation20]] [#allocation17]
    $region102: #{kinematic_lstm_forward.1} parent=1 // pred_fallthru
      _
    %283 = shalt.err (0)
    %s285 = sshll.u32 %s8, 4
    %s286 = int_to_ptr.hbm [resolvable:$true] %s285
    %s287 = sshll.u32 [#allocation5], 4
    %s288 = int_to_ptr.vmem [resolvable:$true] %s287
    %290 = dma.hbm_to_vmem [thread:$0]  %s286, 1024, %s288, %s277
    %v291 = vld [vmem:[%s0] sm:$0xff]
    %v292 = vld [vmem:[%s0 + $0x8] sm:$0xff]
    %v293 = vld [vmem:[%s0 + $0x10] sm:$0xff]
    %v294 = vld [vmem:[%s0 + $0x18] sm:$0xff]
    %v295 = vld [vmem:[%s0 + $0x20] sm:$0xff]
    %v296 = vld [vmem:[%s0 + $0x28] sm:$0xff]
    %v297 = vld [vmem:[%s0 + $0x30] sm:$0xff]
    %v298 = vld [vmem:[%s0 + $0x38] sm:$0xff]
    %v299 = vld [vmem:[%s0 + $0x40] sm:$0xff]
    %v300 = vld [vmem:[%s0 + $0x48] sm:$0xff]
    %v301 = vld [vmem:[%s0 + $0x50] sm:$0xff]
    %v302 = vld [vmem:[%s0 + $0x58] sm:$0xff]
    %v303 = vld [vmem:[%s1] sm:$0xf]
    %v304 = vld [vmem:[%s1 + $0x4] sm:$0xf]
    %v305 = vld [vmem:[%s1 + $0x8] sm:$0xf]
    %v306 = vld [vmem:[%s1 + $0xc] sm:$0xf]
    %v307 = vld [vmem:[%s1 + $0x10] sm:$0xf]
    %v308 = vld [vmem:[%s1 + $0x14] sm:$0xf]
    %v309 = vld [vmem:[%s1 + $0x18] sm:$0xf]
    %v310 = vld [vmem:[%s1 + $0x1c] sm:$0xf]
    %v311 = vld [vmem:[%s1 + $0x20] sm:$0xf]
    %v312 = vld [vmem:[%s1 + $0x24] sm:$0xf]
    %v313 = vld [vmem:[%s1 + $0x28] sm:$0xf]
    %v314 = vld [vmem:[%s1 + $0x2c] sm:$0xf]
    %v315 = vld [vmem:[%s1 + $0x30] sm:$0xf]
    %v316 = vld [vmem:[%s1 + $0x34] sm:$0xf]
    %v317 = vld [vmem:[%s1 + $0x38] sm:$0xf]
    %v318 = vld [vmem:[%s1 + $0x3c] sm:$0xf]
    %v319 = vld [vmem:[%s1 + $0x40] sm:$0xf]
    %v320 = vld [vmem:[%s1 + $0x44] sm:$0xf]
    %v321 = vld [vmem:[%s1 + $0x48] sm:$0xf]
    %v322 = vld [vmem:[%s1 + $0x4c] sm:$0xf]
    %v323 = vld [vmem:[%s1 + $0x50] sm:$0xf]
    %v324 = vld [vmem:[%s1 + $0x54] sm:$0xf]
    %v325 = vld [vmem:[%s1 + $0x58] sm:$0xf]
    %v326 = vld [vmem:[%s1 + $0x5c] sm:$0xf]
    %v327 = vld [vmem:[%s1 + $0x60] sm:$0xf]
    %v328 = vld [vmem:[%s1 + $0x64] sm:$0xf]
    %v329 = vld [vmem:[%s1 + $0x68] sm:$0xf]
    %v330 = vld [vmem:[%s1 + $0x6c] sm:$0xf]
    %v331 = vld [vmem:[%s1 + $0x70] sm:$0xf]
    %v332 = vld [vmem:[%s1 + $0x74] sm:$0xf]
    %v333 = vld [vmem:[%s1 + $0x78] sm:$0xf]
    %v334 = vld [vmem:[%s1 + $0x7c] sm:$0xf]
    %v335 = vld [vmem:[%s1 + $0x80] sm:$0xf]
    %v336 = vld [vmem:[%s1 + $0x84] sm:$0xf]
    %v337 = vld [vmem:[%s1 + $0x88] sm:$0xf]
    %v338 = vld [vmem:[%s1 + $0x8c] sm:$0xf]
    %v339 = vld [vmem:[%s1 + $0x90] sm:$0xf]
    %v340 = vld [vmem:[%s1 + $0x94] sm:$0xf]
    %v341 = vld [vmem:[%s1 + $0x98] sm:$0xf]
    %v342 = vld [vmem:[%s1 + $0x9c] sm:$0xf]
    %v343 = vld [vmem:[%s1 + $0xa0] sm:$0xf]
    %v344 = vld [vmem:[%s1 + $0xa4] sm:$0xf]
    %v345 = vld [vmem:[%s1 + $0xa8] sm:$0xf]
    %v346 = vld [vmem:[%s1 + $0xac] sm:$0xf]
    %v347 = vld [vmem:[%s1 + $0xb0] sm:$0xf]
    %v348 = vld [vmem:[%s1 + $0xb4] sm:$0xf]
    %v349 = vld [vmem:[%s1 + $0xb8] sm:$0xf]
    %v350 = vld [vmem:[%s1 + $0xbc] sm:$0xf]
    %v351 = vld [vmem:[%s1 + $0xc0] sm:$0xf]
    %v352 = vld [vmem:[%s1 + $0xc4] sm:$0xf]
    %v353 = vld [vmem:[%s1 + $0xc8] sm:$0xf]
    %v354 = vld [vmem:[%s1 + $0xcc] sm:$0xf]
    %v355 = vld [vmem:[%s1 + $0xd0] sm:$0xf]
    %v356 = vld [vmem:[%s1 + $0xd4] sm:$0xf]
    %v357 = vld [vmem:[%s1 + $0xd8] sm:$0xf]
    %v358 = vld [vmem:[%s1 + $0xdc] sm:$0xf]
    %v359 = vld [vmem:[%s1 + $0xe0] sm:$0xf]
    %v360 = vld [vmem:[%s1 + $0xe4] sm:$0xf]
    %v361 = vld [vmem:[%s1 + $0xe8] sm:$0xf]
    %v362 = vld [vmem:[%s1 + $0xec] sm:$0xf]
    %v363 = vld [vmem:[%s1 + $0xf0] sm:$0xf]
    %v364 = vld [vmem:[%s1 + $0xf4] sm:$0xf]
    %v365 = vld [vmem:[%s1 + $0xf8] sm:$0xf]
    %v366 = vld [vmem:[%s1 + $0xfc] sm:$0xf]
    %v367 = vld [vmem:[%s1 + $0x100] sm:$0xf]
    %v368 = vld [vmem:[%s1 + $0x104] sm:$0xf]
    %v369 = vld [vmem:[%s1 + $0x108] sm:$0xf]
    %v370 = vld [vmem:[%s1 + $0x10c] sm:$0xf]
    %v371 = vld [vmem:[%s1 + $0x110] sm:$0xf]
    %v372 = vld [vmem:[%s1 + $0x114] sm:$0xf]
    %v373 = vld [vmem:[%s1 + $0x118] sm:$0xf]
    %v374 = vld [vmem:[%s1 + $0x11c] sm:$0xf]
    %v375 = vld [vmem:[%s1 + $0x120] sm:$0xf]
    %v376 = vld [vmem:[%s1 + $0x124] sm:$0xf]
    %v377 = vld [vmem:[%s1 + $0x128] sm:$0xf]
    %v378 = vld [vmem:[%s1 + $0x12c] sm:$0xf]
    %v379 = vld [vmem:[%s1 + $0x130] sm:$0xf]
    %v380 = vld [vmem:[%s1 + $0x134] sm:$0xf]
    %v381 = vld [vmem:[%s1 + $0x138] sm:$0xf]
    %v382 = vld [vmem:[%s1 + $0x13c] sm:$0xf]
    %v383 = vld [vmem:[%s1 + $0x140] sm:$0xf]
    %v384 = vld [vmem:[%s1 + $0x144] sm:$0xf]
    %v385 = vld [vmem:[%s1 + $0x148] sm:$0xf]
    %v386 = vld [vmem:[%s1 + $0x14c] sm:$0xf]
    %v387 = vld [vmem:[%s1 + $0x150] sm:$0xf]
    %v388 = vld [vmem:[%s1 + $0x154] sm:$0xf]
    %v389 = vld [vmem:[%s1 + $0x158] sm:$0xf]
    %v390 = vld [vmem:[%s1 + $0x15c] sm:$0xf]
    %v391 = vld [vmem:[%s1 + $0x160] sm:$0xf]
    %v392 = vld [vmem:[%s1 + $0x164] sm:$0xf]
    %v393 = vld [vmem:[%s1 + $0x168] sm:$0xf]
    %v394 = vld [vmem:[%s1 + $0x16c] sm:$0xf]
    %v395 = vld [vmem:[%s1 + $0x170] sm:$0xf]
    %v396 = vld [vmem:[%s1 + $0x174] sm:$0xf]
    %v397 = vld [vmem:[%s1 + $0x178] sm:$0xf]
    %v398 = vld [vmem:[%s1 + $0x17c] sm:$0xf]
    %v399 = vld [vmem:[#allocation7] sm:$0x1]
    %v401 = vperm.slane %v399, 0
    %v415 = vunpack.c.l.b16 %v291
    %v416 = vunpack.c.h.b16 %v291
    %v417 = vunpack.c.l.b16 %v292
    %v418 = vunpack.c.h.b16 %v292
    %v419 = vunpack.c.l.b16 %v293
    %v420 = vunpack.c.h.b16 %v293
    %v421 = vunpack.c.l.b16 %v294
    %v422 = vunpack.c.h.b16 %v294
    %v423 = vunpack.c.l.b16 %v295
    %v424 = vunpack.c.h.b16 %v295
    %v425 = vunpack.c.l.b16 %v296
    %v426 = vunpack.c.h.b16 %v296
    %v427 = vunpack.c.l.b16 %v297
    %v428 = vunpack.c.h.b16 %v297
    %v429 = vunpack.c.l.b16 %v298
    %v430 = vunpack.c.h.b16 %v298
    %v431 = vunpack.c.l.b16 %v299
    %v432 = vunpack.c.h.b16 %v299
    %v433 = vunpack.c.l.b16 %v300
    %v434 = vunpack.c.h.b16 %v300
    %v435 = vunpack.c.l.b16 %v301
    %v436 = vunpack.c.h.b16 %v301
    %v437 = vunpack.c.l.b16 %v302
    %v438 = vunpack.c.h.b16 %v302
    %v439 = vpack.c.b16 %v421, %v415
    %v440 = vpack.c.b16 %v422, %v416
    %v441 = vpack.c.b16 %v423, %v417
    %v442 = vpack.c.b16 %v424, %v418
    %v443 = vpack.c.b16 %v425, %v419
    %v444 = vpack.c.b16 %v426, %v420
    %v445 = vpack.c.b16 %v433, %v427
    %v446 = vpack.c.b16 %v434, %v428
    %v447 = vpack.c.b16 %v435, %v429
    %v448 = vpack.c.b16 %v436, %v430
    %v449 = vpack.c.b16 %v437, %v431
    %v450 = vpack.c.b16 %v438, %v432
    %v559 = vunpack.c.l.b16 %v303
    %v560 = vunpack.c.l.b16 %v304
    %v561 = vunpack.c.l.b16 %v305
    %v562 = vunpack.c.l.b16 %v306
    %v563 = vunpack.c.l.b16 %v307
    %v564 = vunpack.c.l.b16 %v308
    %v565 = vunpack.c.l.b16 %v309
    %v566 = vunpack.c.l.b16 %v310
    %v567 = vunpack.c.l.b16 %v311
    %v568 = vunpack.c.l.b16 %v312
    %v569 = vunpack.c.l.b16 %v313
    %v570 = vunpack.c.l.b16 %v314
    %v571 = vunpack.c.l.b16 %v315
    %v572 = vunpack.c.l.b16 %v316
    %v573 = vunpack.c.l.b16 %v317
    %v574 = vunpack.c.l.b16 %v318
    %v575 = vunpack.c.l.b16 %v319
    %v576 = vunpack.c.l.b16 %v320
    %v577 = vunpack.c.l.b16 %v321
    %v578 = vunpack.c.l.b16 %v322
    %v579 = vunpack.c.l.b16 %v323
    %v580 = vunpack.c.l.b16 %v324
    %v581 = vunpack.c.l.b16 %v325
    %v582 = vunpack.c.l.b16 %v326
    %v583 = vunpack.c.l.b16 %v327
    %v584 = vunpack.c.l.b16 %v328
    %v585 = vunpack.c.l.b16 %v329
    %v586 = vunpack.c.l.b16 %v330
    %v587 = vunpack.c.l.b16 %v331
    %v588 = vunpack.c.l.b16 %v332
    %v589 = vunpack.c.l.b16 %v333
    %v590 = vunpack.c.l.b16 %v334
    %v591 = vunpack.c.l.b16 %v335
    %v592 = vunpack.c.l.b16 %v336
    %v593 = vunpack.c.l.b16 %v337
    %v594 = vunpack.c.l.b16 %v338
    %v595 = vunpack.c.l.b16 %v339
    %v596 = vunpack.c.l.b16 %v340
    %v597 = vunpack.c.l.b16 %v341
    %v598 = vunpack.c.l.b16 %v342
    %v599 = vunpack.c.l.b16 %v343
    %v600 = vunpack.c.l.b16 %v344
    %v601 = vunpack.c.l.b16 %v345
    %v602 = vunpack.c.l.b16 %v346
    %v603 = vunpack.c.l.b16 %v347
    %v604 = vunpack.c.l.b16 %v348
    %v605 = vunpack.c.l.b16 %v349
    %v606 = vunpack.c.l.b16 %v350
    %v607 = vunpack.c.l.b16 %v351
    %v608 = vunpack.c.l.b16 %v352
    %v609 = vunpack.c.l.b16 %v353
    %v610 = vunpack.c.l.b16 %v354
    %v611 = vunpack.c.l.b16 %v355
    %v612 = vunpack.c.l.b16 %v356
    %v613 = vunpack.c.l.b16 %v357
    %v614 = vunpack.c.l.b16 %v358
    %v615 = vunpack.c.l.b16 %v359
    %v616 = vunpack.c.l.b16 %v360
    %v617 = vunpack.c.l.b16 %v361
    %v618 = vunpack.c.l.b16 %v362
    %v619 = vunpack.c.l.b16 %v363
    %v620 = vunpack.c.l.b16 %v364
    %v621 = vunpack.c.l.b16 %v365
    %v622 = vunpack.c.l.b16 %v366
    %v623 = vunpack.c.l.b16 %v367
    %v624 = vunpack.c.l.b16 %v368
    %v625 = vunpack.c.l.b16 %v369
    %v626 = vunpack.c.l.b16 %v370
    %v627 = vunpack.c.l.b16 %v371
    %v628 = vunpack.c.l.b16 %v372
    %v629 = vunpack.c.l.b16 %v373
    %v630 = vunpack.c.l.b16 %v374
    %v631 = vunpack.c.l.b16 %v375
    %v632 = vunpack.c.l.b16 %v376
    %v633 = vunpack.c.l.b16 %v377
    %v634 = vunpack.c.l.b16 %v378
    %v635 = vunpack.c.l.b16 %v379
    %v636 = vunpack.c.l.b16 %v380
    %v637 = vunpack.c.l.b16 %v381
    %v638 = vunpack.c.l.b16 %v382
    %v639 = vunpack.c.l.b16 %v383
    %v640 = vunpack.c.l.b16 %v384
    %v641 = vunpack.c.l.b16 %v385
    %v642 = vunpack.c.l.b16 %v386
    %v643 = vunpack.c.l.b16 %v387
    %v644 = vunpack.c.l.b16 %v388
    %v645 = vunpack.c.l.b16 %v389
    %v646 = vunpack.c.l.b16 %v390
    %v647 = vunpack.c.l.b16 %v391
    %v648 = vunpack.c.l.b16 %v392
    %v649 = vunpack.c.l.b16 %v393
    %v650 = vunpack.c.l.b16 %v394
    %v651 = vunpack.c.l.b16 %v395
    %v652 = vunpack.c.l.b16 %v396
    %v653 = vunpack.c.l.b16 %v397
    %v654 = vunpack.c.l.b16 %v398
    %v655 = vpack.c.b16 %v560, %v559
    %v656 = vpack.c.b16 %v562, %v561
    %v657 = vpack.c.b16 %v564, %v563
    %v658 = vpack.c.b16 %v566, %v565
    %v659 = vpack.c.b16 %v568, %v567
    %v660 = vpack.c.b16 %v570, %v569
    %v661 = vpack.c.b16 %v572, %v571
    %v662 = vpack.c.b16 %v574, %v573
    %v663 = vpack.c.b16 %v576, %v575
    %v664 = vpack.c.b16 %v578, %v577
    %v665 = vpack.c.b16 %v580, %v579
    %v666 = vpack.c.b16 %v582, %v581
    %v667 = vpack.c.b16 %v584, %v583
    %v668 = vpack.c.b16 %v586, %v585
    %v669 = vpack.c.b16 %v588, %v587
    %v670 = vpack.c.b16 %v590, %v589
    %v671 = vpack.c.b16 %v592, %v591
    %v672 = vpack.c.b16 %v594, %v593
    %v673 = vpack.c.b16 %v596, %v595
    %v674 = vpack.c.b16 %v598, %v597
    %v675 = vpack.c.b16 %v600, %v599
    %v676 = vpack.c.b16 %v602, %v601
    %v677 = vpack.c.b16 %v604, %v603
    %v678 = vpack.c.b16 %v606, %v605
    %v679 = vpack.c.b16 %v608, %v607
    %v680 = vpack.c.b16 %v610, %v609
    %v681 = vpack.c.b16 %v612, %v611
    %v682 = vpack.c.b16 %v614, %v613
    %v683 = vpack.c.b16 %v616, %v615
    %v684 = vpack.c.b16 %v618, %v617
    %v685 = vpack.c.b16 %v620, %v619
    %v686 = vpack.c.b16 %v622, %v621
    %v687 = vpack.c.b16 %v624, %v623
    %v688 = vpack.c.b16 %v626, %v625
    %v689 = vpack.c.b16 %v628, %v627
    %v690 = vpack.c.b16 %v630, %v629
    %v691 = vpack.c.b16 %v632, %v631
    %v692 = vpack.c.b16 %v634, %v633
    %v693 = vpack.c.b16 %v636, %v635
    %v694 = vpack.c.b16 %v638, %v637
    %v695 = vpack.c.b16 %v640, %v639
    %v696 = vpack.c.b16 %v642, %v641
    %v697 = vpack.c.b16 %v644, %v643
    %v698 = vpack.c.b16 %v646, %v645
    %v699 = vpack.c.b16 %v648, %v647
    %v700 = vpack.c.b16 %v650, %v649
    %v701 = vpack.c.b16 %v652, %v651
    %v702 = vpack.c.b16 %v654, %v653
    %751 = vmatpush.bf16.msra.mxu0 %v662
    %752 = vmatpush.bf16.msra.mxu0 %v661
    %753 = vmatpush.bf16.msra.mxu0 %v660
    %754 = vmatpush.bf16.msra.mxu0 %v659
    %755 = vmatpush.bf16.msra.mxu0 %v658
    %756 = vmatpush.bf16.msra.mxu0 %v657
    %757 = vmatpush.bf16.msra.mxu0 %v656
    %758 = vmatpush.bf16.msra.mxu0 %v655
    %759 = vmatmul.bf16.gmra.mxu0 %v439
    %v760 = vpop.f32.mrf.mxu0
    %v761 = vadd.f32 %v401, %v760
    %v762 = vpop.f32.mrf.mxu0
    %v763 = vadd.f32 %v401, %v762
    %764 = vmatmul.bf16.gmra.mxu0 %v445
    %v765 = vpop.f32.mrf.mxu0
    %v766 = vadd.f32 %v401, %v765
    %v767 = vpop.f32.mrf.mxu0
    %v768 = vadd.f32 %v401, %v767
    %769 = vdwg.mxu0
    %770 = vmatpush.bf16.msra.mxu0 %v670
    %771 = vmatpush.bf16.msra.mxu0 %v669
    %772 = vmatpush.bf16.msra.mxu0 %v668
    %773 = vmatpush.bf16.msra.mxu0 %v667
    %774 = vmatpush.bf16.msra.mxu0 %v666
    %775 = vmatpush.bf16.msra.mxu0 %v665
    %776 = vmatpush.bf16.msra.mxu0 %v664
    %777 = vmatpush.bf16.msra.mxu0 %v663
    %778 = vmatmul.bf16.gmra.mxu0 %v440
    %v779 = vpop.f32.mrf.mxu0
    %v780 = vadd.f32 %v761, %v779
    %v781 = vpop.f32.mrf.mxu0
    %v782 = vadd.f32 %v763, %v781
    %783 = vmatmul.bf16.gmra.mxu0 %v446
    %v784 = vpop.f32.mrf.mxu0
    %v785 = vadd.f32 %v766, %v784
    %v786 = vpop.f32.mrf.mxu0
    %v787 = vadd.f32 %v768, %v786
    %788 = vdwg.mxu0
    %789 = vmatpush.bf16.msra.mxu0 %v678
    %790 = vmatpush.bf16.msra.mxu0 %v677
    %791 = vmatpush.bf16.msra.mxu0 %v676
    %792 = vmatpush.bf16.msra.mxu0 %v675
    %793 = vmatpush.bf16.msra.mxu0 %v674
    %794 = vmatpush.bf16.msra.mxu0 %v673
    %795 = vmatpush.bf16.msra.mxu0 %v672
    %796 = vmatpush.bf16.msra.mxu0 %v671
    %797 = vmatmul.bf16.gmra.mxu0 %v441
    %v798 = vpop.f32.mrf.mxu0
    %v799 = vadd.f32 %v780, %v798
    %v800 = vpop.f32.mrf.mxu0
    %v801 = vadd.f32 %v782, %v800
    %802 = vmatmul.bf16.gmra.mxu0 %v447
    %v803 = vpop.f32.mrf.mxu0
    %v804 = vadd.f32 %v785, %v803
    %v805 = vpop.f32.mrf.mxu0
    %v806 = vadd.f32 %v787, %v805
    %807 = vdwg.mxu0
    %808 = vmatpush.bf16.msra.mxu0 %v686
    %809 = vmatpush.bf16.msra.mxu0 %v685
    %810 = vmatpush.bf16.msra.mxu0 %v684
    %811 = vmatpush.bf16.msra.mxu0 %v683
    %812 = vmatpush.bf16.msra.mxu0 %v682
    %813 = vmatpush.bf16.msra.mxu0 %v681
    %814 = vmatpush.bf16.msra.mxu0 %v680
    %815 = vmatpush.bf16.msra.mxu0 %v679
    %816 = vmatmul.bf16.gmra.mxu0 %v442
    %v817 = vpop.f32.mrf.mxu0
    %v818 = vadd.f32 %v799, %v817
    %v819 = vpop.f32.mrf.mxu0
    %v820 = vadd.f32 %v801, %v819
    %821 = vmatmul.bf16.gmra.mxu0 %v448
    %v822 = vpop.f32.mrf.mxu0
    %v823 = vadd.f32 %v804, %v822
    %v824 = vpop.f32.mrf.mxu0
    %v825 = vadd.f32 %v806, %v824
    %826 = vdwg.mxu0
    %827 = vmatpush.bf16.msra.mxu0 %v694
    %828 = vmatpush.bf16.msra.mxu0 %v693
    %829 = vmatpush.bf16.msra.mxu0 %v692
    %830 = vmatpush.bf16.msra.mxu0 %v691
    %831 = vmatpush.bf16.msra.mxu0 %v690
    %832 = vmatpush.bf16.msra.mxu0 %v689
    %833 = vmatpush.bf16.msra.mxu0 %v688
    %834 = vmatpush.bf16.msra.mxu0 %v687
    %835 = vmatmul.bf16.gmra.mxu0 %v443
    %v836 = vpop.f32.mrf.mxu0
    %v837 = vadd.f32 %v818, %v836
    %v838 = vpop.f32.mrf.mxu0
    %v839 = vadd.f32 %v820, %v838
    %840 = vmatmul.bf16.gmra.mxu0 %v449
    %v841 = vpop.f32.mrf.mxu0
    %v842 = vadd.f32 %v823, %v841
    %v843 = vpop.f32.mrf.mxu0
    %v844 = vadd.f32 %v825, %v843
    %845 = vdwg.mxu0
    %846 = vmatpush.bf16.msra.mxu0 %v702
    %847 = vmatpush.bf16.msra.mxu0 %v701
    %848 = vmatpush.bf16.msra.mxu0 %v700
    %849 = vmatpush.bf16.msra.mxu0 %v699
    %850 = vmatpush.bf16.msra.mxu0 %v698
    %851 = vmatpush.bf16.msra.mxu0 %v697
    %852 = vmatpush.bf16.msra.mxu0 %v696
    %853 = vmatpush.bf16.msra.mxu0 %v695
    %854 = vmatmul.bf16.gmra.mxu0 %v444
    %v855 = vpop.f32.mrf.mxu0
    %v856 = vadd.f32 %v837, %v855
    %v857 = vpop.f32.mrf.mxu0
    %v858 = vadd.f32 %v839, %v857
    %859 = vmatmul.bf16.gmra.mxu0 %v450
    %v860 = vpop.f32.mrf.mxu0
    %v861 = vadd.f32 %v842, %v860
    %v862 = vpop.f32.mrf.mxu0
    %v863 = vadd.f32 %v844, %v862
    %864 = vdwg.mxu0
    %v865 = vmax.f32 %v856, 0.0
    %v866 = vmax.f32 %v858, 0.0
    %v867 = vmax.f32 %v861, 0.0
    %v868 = vmax.f32 %v863, 0.0
    %v869 = vpack.c.bf16 %v866, %v865
    %v870 = vpack.c.bf16 %v868, %v867
    %s871 = smul.u32 4, 16
    %s872 = smul.u32 %s871, 4
    %s873 = sshll.u32 %s872, 4
    %874 = dma.done [#allocation6], %s873
    %v875 = vld [vmem:[#allocation2] sm:$0xff]
    %v876 = vld [vmem:[#allocation2 + $0x8] sm:$0xff]
    %v877 = vld [vmem:[#allocation2 + $0x10] sm:$0xff]
    %v878 = vld [vmem:[#allocation2 + $0x18] sm:$0xff]
    %v879 = vld [vmem:[#allocation2 + $0x20] sm:$0xff]
    %v880 = vld [vmem:[#allocation2 + $0x28] sm:$0xff]
    %v881 = vld [vmem:[#allocation2 + $0x30] sm:$0xff]
    %v882 = vld [vmem:[#allocation2 + $0x38] sm:$0xff]
    %v883 = vld [vmem:[#allocation2 + $0x40] sm:$0xff]
    %v884 = vld [vmem:[#allocation2 + $0x48] sm:$0xff]
    %v885 = vld [vmem:[#allocation2 + $0x50] sm:$0xff]
    %v886 = vld [vmem:[#allocation2 + $0x58] sm:$0xff]
    %v887 = vld [vmem:[#allocation2 + $0x60] sm:$0xff]
    %v888 = vld [vmem:[#allocation2 + $0x68] sm:$0xff]
    %v889 = vld [vmem:[#allocation2 + $0x70] sm:$0xff]
    %v890 = vld [vmem:[#allocation2 + $0x78] sm:$0xff]
    %v891 = vld [vmem:[#allocation2 + $0x80] sm:$0xff]
    %v892 = vld [vmem:[#allocation2 + $0x88] sm:$0xff]
    %v893 = vld [vmem:[#allocation2 + $0x90] sm:$0xff]
    %v894 = vld [vmem:[#allocation2 + $0x98] sm:$0xff]
    %v895 = vld [vmem:[#allocation2 + $0xa0] sm:$0xff]
    %v896 = vld [vmem:[#allocation2 + $0xa8] sm:$0xff]
    %v897 = vld [vmem:[#allocation2 + $0xb0] sm:$0xff]
    %v898 = vld [vmem:[#allocation2 + $0xb8] sm:$0xff]
    %v899 = vld [vmem:[#allocation2 + $0xc0] sm:$0xff]
    %v900 = vld [vmem:[#allocation2 + $0xc8] sm:$0xff]
    %v901 = vld [vmem:[#allocation2 + $0xd0] sm:$0xff]
    %v902 = vld [vmem:[#allocation2 + $0xd8] sm:$0xff]
    %v903 = vld [vmem:[#allocation2 + $0xe0] sm:$0xff]
    %v904 = vld [vmem:[#allocation2 + $0xe8] sm:$0xff]
    %v905 = vld [vmem:[#allocation2 + $0xf0] sm:$0xff]
    %v906 = vld [vmem:[#allocation2 + $0xf8] sm:$0xff]
    %v907 = vld [vmem:[#allocation9] sm:$0xf]
    %v909 = vperm.slane %v907, 0
    %v910 = vperm.slane %v907, 1
    %v911 = vperm.slane %v907, 2
    %v912 = vperm.slane %v907, 3
    %v949 = vunpack.c.l.b16 %v875
    %v950 = vunpack.c.h.b16 %v875
    %v951 = vunpack.c.l.b16 %v876
    %v952 = vunpack.c.h.b16 %v876
    %v953 = vunpack.c.l.b16 %v877
    %v954 = vunpack.c.h.b16 %v877
    %v955 = vunpack.c.l.b16 %v878
    %v956 = vunpack.c.h.b16 %v878
    %v957 = vunpack.c.l.b16 %v879
    %v958 = vunpack.c.h.b16 %v879
    %v959 = vunpack.c.l.b16 %v880
    %v960 = vunpack.c.h.b16 %v880
    %v961 = vunpack.c.l.b16 %v881
    %v962 = vunpack.c.h.b16 %v881
    %v963 = vunpack.c.l.b16 %v882
    %v964 = vunpack.c.h.b16 %v882
    %v965 = vunpack.c.l.b16 %v883
    %v966 = vunpack.c.h.b16 %v883
    %v967 = vunpack.c.l.b16 %v884
    %v968 = vunpack.c.h.b16 %v884
    %v969 = vunpack.c.l.b16 %v885
    %v970 = vunpack.c.h.b16 %v885
    %v971 = vunpack.c.l.b16 %v886
    %v972 = vunpack.c.h.b16 %v886
    %v973 = vunpack.c.l.b16 %v887
    %v974 = vunpack.c.h.b16 %v887
    %v975 = vunpack.c.l.b16 %v888
    %v976 = vunpack.c.h.b16 %v888
    %v977 = vunpack.c.l.b16 %v889
    %v978 = vunpack.c.h.b16 %v889
    %v979 = vunpack.c.l.b16 %v890
    %v980 = vunpack.c.h.b16 %v890
    %v981 = vunpack.c.l.b16 %v891
    %v982 = vunpack.c.h.b16 %v891
    %v983 = vunpack.c.l.b16 %v892
    %v984 = vunpack.c.h.b16 %v892
    %v985 = vunpack.c.l.b16 %v893
    %v986 = vunpack.c.h.b16 %v893
    %v987 = vunpack.c.l.b16 %v894
    %v988 = vunpack.c.h.b16 %v894
    %v989 = vunpack.c.l.b16 %v895
    %v990 = vunpack.c.h.b16 %v895
    %v991 = vunpack.c.l.b16 %v896
    %v992 = vunpack.c.h.b16 %v896
    %v993 = vunpack.c.l.b16 %v897
    %v994 = vunpack.c.h.b16 %v897
    %v995 = vunpack.c.l.b16 %v898
    %v996 = vunpack.c.h.b16 %v898
    %v997 = vunpack.c.l.b16 %v899
    %v998 = vunpack.c.h.b16 %v899
    %v999 = vunpack.c.l.b16 %v900
    %v1000 = vunpack.c.h.b16 %v900
    %v1001 = vunpack.c.l.b16 %v901
    %v1002 = vunpack.c.h.b16 %v901
    %v1003 = vunpack.c.l.b16 %v902
    %v1004 = vunpack.c.h.b16 %v902
    %v1005 = vunpack.c.l.b16 %v903
    %v1006 = vunpack.c.h.b16 %v903
    %v1007 = vunpack.c.l.b16 %v904
    %v1008 = vunpack.c.h.b16 %v904
    %v1009 = vunpack.c.l.b16 %v905
    %v1010 = vunpack.c.h.b16 %v905
    %v1011 = vunpack.c.l.b16 %v906
    %v1012 = vunpack.c.h.b16 %v906
    %v1013 = vpack.c.b16 %v953, %v949
    %v1014 = vpack.c.b16 %v954, %v950
    %v1015 = vpack.c.b16 %v955, %v951
    %v1016 = vpack.c.b16 %v956, %v952
    %v1017 = vpack.c.b16 %v961, %v957
    %v1018 = vpack.c.b16 %v962, %v958
    %v1019 = vpack.c.b16 %v963, %v959
    %v1020 = vpack.c.b16 %v964, %v960
    %v1021 = vpack.c.b16 %v969, %v965
    %v1022 = vpack.c.b16 %v970, %v966
    %v1023 = vpack.c.b16 %v971, %v967
    %v1024 = vpack.c.b16 %v972, %v968
    %v1025 = vpack.c.b16 %v977, %v973
    %v1026 = vpack.c.b16 %v978, %v974
    %v1027 = vpack.c.b16 %v979, %v975
    %v1028 = vpack.c.b16 %v980, %v976
    %v1029 = vpack.c.b16 %v985, %v981
    %v1030 = vpack.c.b16 %v986, %v982
    %v1031 = vpack.c.b16 %v987, %v983
    %v1032 = vpack.c.b16 %v988, %v984
    %v1033 = vpack.c.b16 %v993, %v989
    %v1034 = vpack.c.b16 %v994, %v990
    %v1035 = vpack.c.b16 %v995, %v991
    %v1036 = vpack.c.b16 %v996, %v992
    %v1037 = vpack.c.b16 %v1001, %v997
    %v1038 = vpack.c.b16 %v1002, %v998
    %v1039 = vpack.c.b16 %v1003, %v999
    %v1040 = vpack.c.b16 %v1004, %v1000
    %v1041 = vpack.c.b16 %v1009, %v1005
    %v1042 = vpack.c.b16 %v1010, %v1006
    %v1043 = vpack.c.b16 %v1011, %v1007
    %v1044 = vpack.c.b16 %v1012, %v1008
    %1077 = vmatpush.bf16.msra.mxu0 %v1041
    %1078 = vmatpush.bf16.msra.mxu0 %v1037
    %1079 = vmatpush.bf16.msra.mxu0 %v1033
    %1080 = vmatpush.bf16.msra.mxu0 %v1029
    %1081 = vmatpush.bf16.msra.mxu0 %v1025
    %1082 = vmatpush.bf16.msra.mxu0 %v1021
    %1083 = vmatpush.bf16.msra.mxu0 %v1017
    %1084 = vmatpush.bf16.msra.mxu0 %v1013
    %1085 = vmatmul.bf16.gmra.mxu0 %v869
    %v1086 = vpop.f32.mrf.mxu0
    %v1087 = vadd.f32 %v909, %v1086
    %v1088 = vpop.f32.mrf.mxu0
    %v1089 = vadd.f32 %v909, %v1088
    %1090 = vmatmul.bf16.gmra.mxu0 %v870
    %v1091 = vpop.f32.mrf.mxu0
    %v1092 = vadd.f32 %v909, %v1091
    %v1093 = vpop.f32.mrf.mxu0
    %v1094 = vadd.f32 %v909, %v1093
    %1095 = vdwg.mxu0
    %1096 = vmatpush.bf16.msra.mxu0 %v1042
    %1097 = vmatpush.bf16.msra.mxu0 %v1038
    %1098 = vmatpush.bf16.msra.mxu0 %v1034
    %1099 = vmatpush.bf16.msra.mxu0 %v1030
    %1100 = vmatpush.bf16.msra.mxu0 %v1026
    %1101 = vmatpush.bf16.msra.mxu0 %v1022
    %1102 = vmatpush.bf16.msra.mxu0 %v1018
    %1103 = vmatpush.bf16.msra.mxu0 %v1014
    %1104 = vmatmul.bf16.gmra.mxu0 %v869
    %v1105 = vpop.f32.mrf.mxu0
    %v1106 = vadd.f32 %v910, %v1105
    %v1107 = vpop.f32.mrf.mxu0
    %v1108 = vadd.f32 %v910, %v1107
    %1109 = vmatmul.bf16.gmra.mxu0 %v870
    %v1110 = vpop.f32.mrf.mxu0
    %v1111 = vadd.f32 %v910, %v1110
    %v1112 = vpop.f32.mrf.mxu0
    %v1113 = vadd.f32 %v910, %v1112
    %1114 = vdwg.mxu0
    %1115 = vmatpush.bf16.msra.mxu0 %v1043
    %1116 = vmatpush.bf16.msra.mxu0 %v1039
    %1117 = vmatpush.bf16.msra.mxu0 %v1035
    %1118 = vmatpush.bf16.msra.mxu0 %v1031
    %1119 = vmatpush.bf16.msra.mxu0 %v1027
    %1120 = vmatpush.bf16.msra.mxu0 %v1023
    %1121 = vmatpush.bf16.msra.mxu0 %v1019
    %1122 = vmatpush.bf16.msra.mxu0 %v1015
    %1123 = vmatmul.bf16.gmra.mxu0 %v869
    %v1124 = vpop.f32.mrf.mxu0
    %v1125 = vadd.f32 %v911, %v1124
    %v1126 = vpop.f32.mrf.mxu0
    %v1127 = vadd.f32 %v911, %v1126
    %1128 = vmatmul.bf16.gmra.mxu0 %v870
    %v1129 = vpop.f32.mrf.mxu0
    %v1130 = vadd.f32 %v911, %v1129
    %v1131 = vpop.f32.mrf.mxu0
    %v1132 = vadd.f32 %v911, %v1131
    %1133 = vdwg.mxu0
    %1134 = vmatpush.bf16.msra.mxu0 %v1044
    %1135 = vmatpush.bf16.msra.mxu0 %v1040
    %1136 = vmatpush.bf16.msra.mxu0 %v1036
    %1137 = vmatpush.bf16.msra.mxu0 %v1032
    %1138 = vmatpush.bf16.msra.mxu0 %v1028
    %1139 = vmatpush.bf16.msra.mxu0 %v1024
    %1140 = vmatpush.bf16.msra.mxu0 %v1020
    %1141 = vmatpush.bf16.msra.mxu0 %v1016
    %1142 = vmatmul.bf16.gmra.mxu0 %v869
    %v1143 = vpop.f32.mrf.mxu0
    %v1144 = vadd.f32 %v912, %v1143
    %v1145 = vpop.f32.mrf.mxu0
    %v1146 = vadd.f32 %v912, %v1145
    %1147 = vmatmul.bf16.gmra.mxu0 %v870
    %v1148 = vpop.f32.mrf.mxu0
    %v1149 = vadd.f32 %v912, %v1148
    %v1150 = vpop.f32.mrf.mxu0
    %v1151 = vadd.f32 %v912, %v1150
    %1152 = vdwg.mxu0
    %s1153 = sshll.u32 %s872, 4
    %1154 = dma.done %s163, %s1153
    %v1155 = vld [vmem:[#allocation3] sm:$0xff]
    %v1156 = vld [vmem:[#allocation3 + $0x8] sm:$0xff]
    %v1157 = vld [vmem:[#allocation3 + $0x10] sm:$0xff]
    %v1158 = vld [vmem:[#allocation3 + $0x18] sm:$0xff]
    %v1159 = vld [vmem:[#allocation3 + $0x20] sm:$0xff]
    %v1160 = vld [vmem:[#allocation3 + $0x28] sm:$0xff]
    %v1161 = vld [vmem:[#allocation3 + $0x30] sm:$0xff]
    %v1162 = vld [vmem:[#allocation3 + $0x38] sm:$0xff]
    %v1163 = vld [vmem:[#allocation3 + $0x40] sm:$0xff]
    %v1164 = vld [vmem:[#allocation3 + $0x48] sm:$0xff]
    %v1165 = vld [vmem:[#allocation3 + $0x50] sm:$0xff]
    %v1166 = vld [vmem:[#allocation3 + $0x58] sm:$0xff]
    %v1167 = vld [vmem:[#allocation3 + $0x60] sm:$0xff]
    %v1168 = vld [vmem:[#allocation3 + $0x68] sm:$0xff]
    %v1169 = vld [vmem:[#allocation3 + $0x70] sm:$0xff]
    %v1170 = vld [vmem:[#allocation3 + $0x78] sm:$0xff]
    %v1171 = vld [vmem:[#allocation3 + $0x80] sm:$0xff]
    %v1172 = vld [vmem:[#allocation3 + $0x88] sm:$0xff]
    %v1173 = vld [vmem:[#allocation3 + $0x90] sm:$0xff]
    %v1174 = vld [vmem:[#allocation3 + $0x98] sm:$0xff]
    %v1175 = vld [vmem:[#allocation3 + $0xa0] sm:$0xff]
    %v1176 = vld [vmem:[#allocation3 + $0xa8] sm:$0xff]
    %v1177 = vld [vmem:[#allocation3 + $0xb0] sm:$0xff]
    %v1178 = vld [vmem:[#allocation3 + $0xb8] sm:$0xff]
    %v1179 = vld [vmem:[#allocation3 + $0xc0] sm:$0xff]
    %v1180 = vld [vmem:[#allocation3 + $0xc8] sm:$0xff]
    %v1181 = vld [vmem:[#allocation3 + $0xd0] sm:$0xff]
    %v1182 = vld [vmem:[#allocation3 + $0xd8] sm:$0xff]
    %v1183 = vld [vmem:[#allocation3 + $0xe0] sm:$0xff]
    %v1184 = vld [vmem:[#allocation3 + $0xe8] sm:$0xff]
    %v1185 = vld [vmem:[#allocation3 + $0xf0] sm:$0xff]
    %v1186 = vld [vmem:[#allocation3 + $0xf8] sm:$0xff]
    %v1219 = vunpack.c.l.b16 %v1155
    %v1220 = vunpack.c.h.b16 %v1155
    %v1221 = vunpack.c.l.b16 %v1156
    %v1222 = vunpack.c.h.b16 %v1156
    %v1223 = vunpack.c.l.b16 %v1157
    %v1224 = vunpack.c.h.b16 %v1157
    %v1225 = vunpack.c.l.b16 %v1158
    %v1226 = vunpack.c.h.b16 %v1158
    %v1227 = vunpack.c.l.b16 %v1159
    %v1228 = vunpack.c.h.b16 %v1159
    %v1229 = vunpack.c.l.b16 %v1160
    %v1230 = vunpack.c.h.b16 %v1160
    %v1231 = vunpack.c.l.b16 %v1161
    %v1232 = vunpack.c.h.b16 %v1161
    %v1233 = vunpack.c.l.b16 %v1162
    %v1234 = vunpack.c.h.b16 %v1162
    %v1235 = vunpack.c.l.b16 %v1163
    %v1236 = vunpack.c.h.b16 %v1163
    %v1237 = vunpack.c.l.b16 %v1164
    %v1238 = vunpack.c.h.b16 %v1164
    %v1239 = vunpack.c.l.b16 %v1165
    %v1240 = vunpack.c.h.b16 %v1165
    %v1241 = vunpack.c.l.b16 %v1166
    %v1242 = vunpack.c.h.b16 %v1166
    %v1243 = vunpack.c.l.b16 %v1167
    %v1244 = vunpack.c.h.b16 %v1167
    %v1245 = vunpack.c.l.b16 %v1168
    %v1246 = vunpack.c.h.b16 %v1168
    %v1247 = vunpack.c.l.b16 %v1169
    %v1248 = vunpack.c.h.b16 %v1169
    %v1249 = vunpack.c.l.b16 %v1170
    %v1250 = vunpack.c.h.b16 %v1170
    %v1251 = vunpack.c.l.b16 %v1171
    %v1252 = vunpack.c.h.b16 %v1171
    %v1253 = vunpack.c.l.b16 %v1172
    %v1254 = vunpack.c.h.b16 %v1172
    %v1255 = vunpack.c.l.b16 %v1173
    %v1256 = vunpack.c.h.b16 %v1173
    %v1257 = vunpack.c.l.b16 %v1174
    %v1258 = vunpack.c.h.b16 %v1174
    %v1259 = vunpack.c.l.b16 %v1175
    %v1260 = vunpack.c.h.b16 %v1175
    %v1261 = vunpack.c.l.b16 %v1176
    %v1262 = vunpack.c.h.b16 %v1176
    %v1263 = vunpack.c.l.b16 %v1177
    %v1264 = vunpack.c.h.b16 %v1177
    %v1265 = vunpack.c.l.b16 %v1178
    %v1266 = vunpack.c.h.b16 %v1178
    %v1267 = vunpack.c.l.b16 %v1179
    %v1268 = vunpack.c.h.b16 %v1179
    %v1269 = vunpack.c.l.b16 %v1180
    %v1270 = vunpack.c.h.b16 %v1180
    %v1271 = vunpack.c.l.b16 %v1181
    %v1272 = vunpack.c.h.b16 %v1181
    %v1273 = vunpack.c.l.b16 %v1182
    %v1274 = vunpack.c.h.b16 %v1182
    %v1275 = vunpack.c.l.b16 %v1183
    %v1276 = vunpack.c.h.b16 %v1183
    %v1277 = vunpack.c.l.b16 %v1184
    %v1278 = vunpack.c.h.b16 %v1184
    %v1279 = vunpack.c.l.b16 %v1185
    %v1280 = vunpack.c.h.b16 %v1185
    %v1281 = vunpack.c.l.b16 %v1186
    %v1282 = vunpack.c.h.b16 %v1186
    %v1283 = vpack.c.b16 %v1223, %v1219
    %v1284 = vpack.c.b16 %v1224, %v1220
    %v1285 = vpack.c.b16 %v1225, %v1221
    %v1286 = vpack.c.b16 %v1226, %v1222
    %v1287 = vpack.c.b16 %v1231, %v1227
    %v1288 = vpack.c.b16 %v1232, %v1228
    %v1289 = vpack.c.b16 %v1233, %v1229
    %v1290 = vpack.c.b16 %v1234, %v1230
    %v1291 = vpack.c.b16 %v1239, %v1235
    %v1292 = vpack.c.b16 %v1240, %v1236
    %v1293 = vpack.c.b16 %v1241, %v1237
    %v1294 = vpack.c.b16 %v1242, %v1238
    %v1295 = vpack.c.b16 %v1247, %v1243
    %v1296 = vpack.c.b16 %v1248, %v1244
    %v1297 = vpack.c.b16 %v1249, %v1245
    %v1298 = vpack.c.b16 %v1250, %v1246
    %v1299 = vpack.c.b16 %v1255, %v1251
    %v1300 = vpack.c.b16 %v1256, %v1252
    %v1301 = vpack.c.b16 %v1257, %v1253
    %v1302 = vpack.c.b16 %v1258, %v1254
    %v1303 = vpack.c.b16 %v1263, %v1259
    %v1304 = vpack.c.b16 %v1264, %v1260
    %v1305 = vpack.c.b16 %v1265, %v1261
    %v1306 = vpack.c.b16 %v1266, %v1262
    %v1307 = vpack.c.b16 %v1271, %v1267
    %v1308 = vpack.c.b16 %v1272, %v1268
    %v1309 = vpack.c.b16 %v1273, %v1269
    %v1310 = vpack.c.b16 %v1274, %v1270
    %v1311 = vpack.c.b16 %v1279, %v1275
    %v1312 = vpack.c.b16 %v1280, %v1276
    %v1313 = vpack.c.b16 %v1281, %v1277
    %v1314 = vpack.c.b16 %v1282, %v1278
    %1347 = vmatpush.bf16.msra.mxu0 %v1311
    %1348 = vmatpush.bf16.msra.mxu0 %v1307
    %1349 = vmatpush.bf16.msra.mxu0 %v1303
    %1350 = vmatpush.bf16.msra.mxu0 %v1299
    %1351 = vmatpush.bf16.msra.mxu0 %v1295
    %1352 = vmatpush.bf16.msra.mxu0 %v1291
    %1353 = vmatpush.bf16.msra.mxu0 %v1287
    %1354 = vmatpush.bf16.msra.mxu0 %v1283
    %1355 = vmatmul.bf16.gmra.mxu0 0
    %v1356 = vpop.f32.mrf.mxu0
    %v1357 = vadd.f32 0.0, %v1356
    %v1358 = vpop.f32.mrf.mxu0
    %1359 = vdwg.mxu0
    %1360 = vmatpush.bf16.msra.mxu0 %v1312
    %1361 = vmatpush.bf16.msra.mxu0 %v1308
    %1362 = vmatpush.bf16.msra.mxu0 %v1304
    %1363 = vmatpush.bf16.msra.mxu0 %v1300
    %1364 = vmatpush.bf16.msra.mxu0 %v1296
    %1365 = vmatpush.bf16.msra.mxu0 %v1292
    %1366 = vmatpush.bf16.msra.mxu0 %v1288
    %1367 = vmatpush.bf16.msra.mxu0 %v1284
    %1368 = vmatmul.bf16.gmra.mxu0 0
    %v1369 = vpop.f32.mrf.mxu0
    %v1370 = vadd.f32 0.0, %v1369
    %v1371 = vpop.f32.mrf.mxu0
    %1372 = vdwg.mxu0
    %1373 = vmatpush.bf16.msra.mxu0 %v1313
    %1374 = vmatpush.bf16.msra.mxu0 %v1309
    %1375 = vmatpush.bf16.msra.mxu0 %v1305
    %1376 = vmatpush.bf16.msra.mxu0 %v1301
    %1377 = vmatpush.bf16.msra.mxu0 %v1297
    %1378 = vmatpush.bf16.msra.mxu0 %v1293
    %1379 = vmatpush.bf16.msra.mxu0 %v1289
    %1380 = vmatpush.bf16.msra.mxu0 %v1285
    %1381 = vmatmul.bf16.gmra.mxu0 0
    %v1382 = vpop.f32.mrf.mxu0
    %v1383 = vadd.f32 0.0, %v1382
    %v1384 = vpop.f32.mrf.mxu0
    %1385 = vdwg.mxu0
    %1386 = vmatpush.bf16.msra.mxu0 %v1314
    %1387 = vmatpush.bf16.msra.mxu0 %v1310
    %1388 = vmatpush.bf16.msra.mxu0 %v1306
    %1389 = vmatpush.bf16.msra.mxu0 %v1302
    %1390 = vmatpush.bf16.msra.mxu0 %v1298
    %1391 = vmatpush.bf16.msra.mxu0 %v1294
    %1392 = vmatpush.bf16.msra.mxu0 %v1290
    %1393 = vmatpush.bf16.msra.mxu0 %v1286
    %1394 = vmatmul.bf16.gmra.mxu0 0
    %v1395 = vpop.f32.mrf.mxu0
    %v1396 = vadd.f32 0.0, %v1395
    %v1397 = vpop.f32.mrf.mxu0
    %1398 = vdwg.mxu0
    %v1399 = vadd.f32 %v1087, %v1357
    %v1400 = vadd.f32 %v1106, %v1370
    %v1401 = vadd.f32 %v1125, %v1383
    %v1402 = vadd.f32 %v1144, %v1396
    %v1403 = vxor.u32 %v1399, 2147483648
    %v1404 = vmul.f32 %v1403, 1.442695
    %v1405 = vpow.pop %v1404
    %v1406 = vadd.f32 %v1405, 1.0
    %v1407 = vrcp.pop %v1406
    %v1408 = vmul.f32 %v1406, %v1407
    %v1409 = vsub.f32 1.0, %v1408
    %v1410 = vmul.f32 %v1407, %v1409
    %v1411 = vadd.f32 %v1407, %v1410
    %vm1412 = vweird.f32 %v1406
    %vm1413 = vweird.f32 %v1407
    %vm1414 = vmor %vm1412, %vm1413
    %v1415 = vsel %vm1414, %v1407, %v1411
    %v1416 = vand.u32 2147483647, %v1406
    %vm1417 = vcmp.eq.f32.partialorder %v1416, 8.507059e+37
    %v1418 = vand.u32 %v1406, 2147483648
    %v1419 = vor.u32 1.1754944e-38, %v1418
    %v1420 = vsel %vm1417, %v1419, %v1415
    %v1421 = vmul.f32 1.0, %v1420
    %v1422 = vxor.u32 %v1400, 2147483648
    %v1423 = vmul.f32 %v1422, 1.442695
    %v1424 = vpow.pop %v1423
    %v1425 = vadd.f32 %v1424, 1.0
    %v1426 = vrcp.pop %v1425
    %v1427 = vmul.f32 %v1425, %v1426
    %v1428 = vsub.f32 1.0, %v1427
    %v1429 = vmul.f32 %v1426, %v1428
    %v1430 = vadd.f32 %v1426, %v1429
    %vm1431 = vweird.f32 %v1425
    %vm1432 = vweird.f32 %v1426
    %vm1433 = vmor %vm1431, %vm1432
    %v1434 = vsel %vm1433, %v1426, %v1430
    %v1435 = vand.u32 2147483647, %v1425
    %vm1436 = vcmp.eq.f32.partialorder %v1435, 8.507059e+37
    %v1437 = vand.u32 %v1425, 2147483648
    %v1438 = vor.u32 1.1754944e-38, %v1437
    %v1439 = vsel %vm1436, %v1438, %v1434
    %v1440 = vmul.f32 1.0, %v1439
    %v1441 = vtanh.pop %v1401
    %v1442 = vxor.u32 %v1402, 2147483648
    %v1443 = vmul.f32 %v1442, 1.442695
    %v1444 = vpow.pop %v1443
    %v1445 = vadd.f32 %v1444, 1.0
    %v1446 = vrcp.pop %v1445
    %v1447 = vmul.f32 %v1445, %v1446
    %v1448 = vsub.f32 1.0, %v1447
    %v1449 = vmul.f32 %v1446, %v1448
    %v1450 = vadd.f32 %v1446, %v1449
    %vm1451 = vweird.f32 %v1445
    %vm1452 = vweird.f32 %v1446
    %vm1453 = vmor %vm1451, %vm1452
    %v1454 = vsel %vm1453, %v1446, %v1450
    %v1455 = vand.u32 2147483647, %v1445
    %vm1456 = vcmp.eq.f32.partialorder %v1455, 8.507059e+37
    %v1457 = vand.u32 %v1445, 2147483648
    %v1458 = vor.u32 1.1754944e-38, %v1457
    %v1459 = vsel %vm1456, %v1458, %v1454
    %v1460 = vmul.f32 1.0, %v1459
    %v1461 = vmul.f32 %v1440, 0.0
    %v1462 = vmul.f32 %v1421, %v1441
    %v1463 = vadd.f32 %v1461, %v1462
    %v1464 = vtanh.pop %v1463
    %v1465 = vmul.f32 %v1460, %v1464
    %v1466 = vpack.c.bf16 %v1465, %v1465
    %1467 = vmatpush.bf16.msra.mxu0 %v1311
    %1468 = vmatpush.bf16.msra.mxu0 %v1307
    %1469 = vmatpush.bf16.msra.mxu0 %v1303
    %1470 = vmatpush.bf16.msra.mxu0 %v1299
    %1471 = vmatpush.bf16.msra.mxu0 %v1295
    %1472 = vmatpush.bf16.msra.mxu0 %v1291
    %1473 = vmatpush.bf16.msra.mxu0 %v1287
    %1474 = vmatpush.bf16.msra.mxu0 %v1283
    %1475 = vmatmul.bf16.gmra.mxu0 %v1466
    %v1476 = vpop.f32.mrf.mxu0
    %v1477 = vadd.f32 0.0, %v1476
    %v1478 = vpop.f32.mrf.mxu0
    %1479 = vdwg.mxu0
    %1480 = vmatpush.bf16.msra.mxu0 %v1312
    %1481 = vmatpush.bf16.msra.mxu0 %v1308
    %1482 = vmatpush.bf16.msra.mxu0 %v1304
    %1483 = vmatpush.bf16.msra.mxu0 %v1300
    %1484 = vmatpush.bf16.msra.mxu0 %v1296
    %1485 = vmatpush.bf16.msra.mxu0 %v1292
    %1486 = vmatpush.bf16.msra.mxu0 %v1288
    %1487 = vmatpush.bf16.msra.mxu0 %v1284
    %1488 = vmatmul.bf16.gmra.mxu0 %v1466
    %v1489 = vpop.f32.mrf.mxu0
    %v1490 = vadd.f32 0.0, %v1489
    %v1491 = vpop.f32.mrf.mxu0
    %1492 = vdwg.mxu0
    %1493 = vmatpush.bf16.msra.mxu0 %v1313
    %1494 = vmatpush.bf16.msra.mxu0 %v1309
    %1495 = vmatpush.bf16.msra.mxu0 %v1305
    %1496 = vmatpush.bf16.msra.mxu0 %v1301
    %1497 = vmatpush.bf16.msra.mxu0 %v1297
    %1498 = vmatpush.bf16.msra.mxu0 %v1293
    %1499 = vmatpush.bf16.msra.mxu0 %v1289
    %1500 = vmatpush.bf16.msra.mxu0 %v1285
    %1501 = vmatmul.bf16.gmra.mxu0 %v1466
    %v1502 = vpop.f32.mrf.mxu0
    %v1503 = vadd.f32 0.0, %v1502
    %v1504 = vpop.f32.mrf.mxu0
    %1505 = vdwg.mxu0
    %1506 = vmatpush.bf16.msra.mxu0 %v1314
    %1507 = vmatpush.bf16.msra.mxu0 %v1310
    %1508 = vmatpush.bf16.msra.mxu0 %v1306
    %1509 = vmatpush.bf16.msra.mxu0 %v1302
    %1510 = vmatpush.bf16.msra.mxu0 %v1298
    %1511 = vmatpush.bf16.msra.mxu0 %v1294
    %1512 = vmatpush.bf16.msra.mxu0 %v1290
    %1513 = vmatpush.bf16.msra.mxu0 %v1286
    %1514 = vmatmul.bf16.gmra.mxu0 %v1466
    %v1515 = vpop.f32.mrf.mxu0
    %v1516 = vadd.f32 0.0, %v1515
    %v1517 = vpop.f32.mrf.mxu0
    %1518 = vdwg.mxu0
    %v1519 = vadd.f32 %v1089, %v1477
    %v1520 = vadd.f32 %v1108, %v1490
    %v1521 = vadd.f32 %v1127, %v1503
    %v1522 = vadd.f32 %v1146, %v1516
    %v1523 = vxor.u32 %v1519, 2147483648
    %v1524 = vmul.f32 %v1523, 1.442695
    %v1525 = vpow.pop %v1524
    %v1526 = vadd.f32 %v1525, 1.0
    %v1527 = vrcp.pop %v1526
    %v1528 = vmul.f32 %v1526, %v1527
    %v1529 = vsub.f32 1.0, %v1528
    %v1530 = vmul.f32 %v1527, %v1529
    %v1531 = vadd.f32 %v1527, %v1530
    %vm1532 = vweird.f32 %v1526
    %vm1533 = vweird.f32 %v1527
    %vm1534 = vmor %vm1532, %vm1533
    %v1535 = vsel %vm1534, %v1527, %v1531
    %v1536 = vand.u32 2147483647, %v1526
    %vm1537 = vcmp.eq.f32.partialorder %v1536, 8.507059e+37
    %v1538 = vand.u32 %v1526, 2147483648
    %v1539 = vor.u32 1.1754944e-38, %v1538
    %v1540 = vsel %vm1537, %v1539, %v1535
    %v1541 = vmul.f32 1.0, %v1540
    %v1542 = vxor.u32 %v1520, 2147483648
    %v1543 = vmul.f32 %v1542, 1.442695
    %v1544 = vpow.pop %v1543
    %v1545 = vadd.f32 %v1544, 1.0
    %v1546 = vrcp.pop %v1545
    %v1547 = vmul.f32 %v1545, %v1546
    %v1548 = vsub.f32 1.0, %v1547
    %v1549 = vmul.f32 %v1546, %v1548
    %v1550 = vadd.f32 %v1546, %v1549
    %vm1551 = vweird.f32 %v1545
    %vm1552 = vweird.f32 %v1546
    %vm1553 = vmor %vm1551, %vm1552
    %v1554 = vsel %vm1553, %v1546, %v1550
    %v1555 = vand.u32 2147483647, %v1545
    %vm1556 = vcmp.eq.f32.partialorder %v1555, 8.507059e+37
    %v1557 = vand.u32 %v1545, 2147483648
    %v1558 = vor.u32 1.1754944e-38, %v1557
    %v1559 = vsel %vm1556, %v1558, %v1554
    %v1560 = vmul.f32 1.0, %v1559
    %v1561 = vtanh.pop %v1521
    %v1562 = vxor.u32 %v1522, 2147483648
    %v1563 = vmul.f32 %v1562, 1.442695
    %v1564 = vpow.pop %v1563
    %v1565 = vadd.f32 %v1564, 1.0
    %v1566 = vrcp.pop %v1565
    %v1567 = vmul.f32 %v1565, %v1566
    %v1568 = vsub.f32 1.0, %v1567
    %v1569 = vmul.f32 %v1566, %v1568
    %v1570 = vadd.f32 %v1566, %v1569
    %vm1571 = vweird.f32 %v1565
    %vm1572 = vweird.f32 %v1566
    %vm1573 = vmor %vm1571, %vm1572
    %v1574 = vsel %vm1573, %v1566, %v1570
    %v1575 = vand.u32 2147483647, %v1565
    %vm1576 = vcmp.eq.f32.partialorder %v1575, 8.507059e+37
    %v1577 = vand.u32 %v1565, 2147483648
    %v1578 = vor.u32 1.1754944e-38, %v1577
    %v1579 = vsel %vm1576, %v1578, %v1574
    %v1580 = vmul.f32 1.0, %v1579
    %v1581 = vmul.f32 %v1560, %v1463
    %v1582 = vmul.f32 %v1541, %v1561
    %v1583 = vadd.f32 %v1581, %v1582
    %v1584 = vtanh.pop %v1583
    %v1585 = vmul.f32 %v1580, %v1584
    %v1586 = vpack.c.bf16 %v1585, %v1585
    %1587 = vmatpush.bf16.msra.mxu0 %v1311
    %1588 = vmatpush.bf16.msra.mxu0 %v1307
    %1589 = vmatpush.bf16.msra.mxu0 %v1303
    %1590 = vmatpush.bf16.msra.mxu0 %v1299
    %1591 = vmatpush.bf16.msra.mxu0 %v1295
    %1592 = vmatpush.bf16.msra.mxu0 %v1291
    %1593 = vmatpush.bf16.msra.mxu0 %v1287
    %1594 = vmatpush.bf16.msra.mxu0 %v1283
    %1595 = vmatmul.bf16.gmra.mxu0 %v1586
    %v1596 = vpop.f32.mrf.mxu0
    %v1597 = vadd.f32 0.0, %v1596
    %v1598 = vpop.f32.mrf.mxu0
    %1599 = vdwg.mxu0
    %1600 = vmatpush.bf16.msra.mxu0 %v1312
    %1601 = vmatpush.bf16.msra.mxu0 %v1308
    %1602 = vmatpush.bf16.msra.mxu0 %v1304
    %1603 = vmatpush.bf16.msra.mxu0 %v1300
    %1604 = vmatpush.bf16.msra.mxu0 %v1296
    %1605 = vmatpush.bf16.msra.mxu0 %v1292
    %1606 = vmatpush.bf16.msra.mxu0 %v1288
    %1607 = vmatpush.bf16.msra.mxu0 %v1284
    %1608 = vmatmul.bf16.gmra.mxu0 %v1586
    %v1609 = vpop.f32.mrf.mxu0
    %v1610 = vadd.f32 0.0, %v1609
    %v1611 = vpop.f32.mrf.mxu0
    %1612 = vdwg.mxu0
    %1613 = vmatpush.bf16.msra.mxu0 %v1313
    %1614 = vmatpush.bf16.msra.mxu0 %v1309
    %1615 = vmatpush.bf16.msra.mxu0 %v1305
    %1616 = vmatpush.bf16.msra.mxu0 %v1301
    %1617 = vmatpush.bf16.msra.mxu0 %v1297
    %1618 = vmatpush.bf16.msra.mxu0 %v1293
    %1619 = vmatpush.bf16.msra.mxu0 %v1289
    %1620 = vmatpush.bf16.msra.mxu0 %v1285
    %1621 = vmatmul.bf16.gmra.mxu0 %v1586
    %v1622 = vpop.f32.mrf.mxu0
    %v1623 = vadd.f32 0.0, %v1622
    %v1624 = vpop.f32.mrf.mxu0
    %1625 = vdwg.mxu0
    %1626 = vmatpush.bf16.msra.mxu0 %v1314
    %1627 = vmatpush.bf16.msra.mxu0 %v1310
    %1628 = vmatpush.bf16.msra.mxu0 %v1306
    %1629 = vmatpush.bf16.msra.mxu0 %v1302
    %1630 = vmatpush.bf16.msra.mxu0 %v1298
    %1631 = vmatpush.bf16.msra.mxu0 %v1294
    %1632 = vmatpush.bf16.msra.mxu0 %v1290
    %1633 = vmatpush.bf16.msra.mxu0 %v1286
    %1634 = vmatmul.bf16.gmra.mxu0 %v1586
    %v1635 = vpop.f32.mrf.mxu0
    %v1636 = vadd.f32 0.0, %v1635
    %v1637 = vpop.f32.mrf.mxu0
    %1638 = vdwg.mxu0
    %v1639 = vadd.f32 %v1092, %v1597
    %v1640 = vadd.f32 %v1111, %v1610
    %v1641 = vadd.f32 %v1130, %v1623
    %v1642 = vadd.f32 %v1149, %v1636
    %v1643 = vxor.u32 %v1639, 2147483648
    %v1644 = vmul.f32 %v1643, 1.442695
    %v1645 = vpow.pop %v1644
    %v1646 = vadd.f32 %v1645, 1.0
    %v1647 = vrcp.pop %v1646
    %v1648 = vmul.f32 %v1646, %v1647
    %v1649 = vsub.f32 1.0, %v1648
    %v1650 = vmul.f32 %v1647, %v1649
    %v1651 = vadd.f32 %v1647, %v1650
    %vm1652 = vweird.f32 %v1646
    %vm1653 = vweird.f32 %v1647
    %vm1654 = vmor %vm1652, %vm1653
    %v1655 = vsel %vm1654, %v1647, %v1651
    %v1656 = vand.u32 2147483647, %v1646
    %vm1657 = vcmp.eq.f32.partialorder %v1656, 8.507059e+37
    %v1658 = vand.u32 %v1646, 2147483648
    %v1659 = vor.u32 1.1754944e-38, %v1658
    %v1660 = vsel %vm1657, %v1659, %v1655
    %v1661 = vmul.f32 1.0, %v1660
    %v1662 = vxor.u32 %v1640, 2147483648
    %v1663 = vmul.f32 %v1662, 1.442695
    %v1664 = vpow.pop %v1663
    %v1665 = vadd.f32 %v1664, 1.0
    %v1666 = vrcp.pop %v1665
    %v1667 = vmul.f32 %v1665, %v1666
    %v1668 = vsub.f32 1.0, %v1667
    %v1669 = vmul.f32 %v1666, %v1668
    %v1670 = vadd.f32 %v1666, %v1669
    %vm1671 = vweird.f32 %v1665
    %vm1672 = vweird.f32 %v1666
    %vm1673 = vmor %vm1671, %vm1672
    %v1674 = vsel %vm1673, %v1666, %v1670
    %v1675 = vand.u32 2147483647, %v1665
    %vm1676 = vcmp.eq.f32.partialorder %v1675, 8.507059e+37
    %v1677 = vand.u32 %v1665, 2147483648
    %v1678 = vor.u32 1.1754944e-38, %v1677
    %v1679 = vsel %vm1676, %v1678, %v1674
    %v1680 = vmul.f32 1.0, %v1679
    %v1681 = vtanh.pop %v1641
    %v1682 = vxor.u32 %v1642, 2147483648
    %v1683 = vmul.f32 %v1682, 1.442695
    %v1684 = vpow.pop %v1683
    %v1685 = vadd.f32 %v1684, 1.0
    %v1686 = vrcp.pop %v1685
    %v1687 = vmul.f32 %v1685, %v1686
    %v1688 = vsub.f32 1.0, %v1687
    %v1689 = vmul.f32 %v1686, %v1688
    %v1690 = vadd.f32 %v1686, %v1689
    %vm1691 = vweird.f32 %v1685
    %vm1692 = vweird.f32 %v1686
    %vm1693 = vmor %vm1691, %vm1692
    %v1694 = vsel %vm1693, %v1686, %v1690
    %v1695 = vand.u32 2147483647, %v1685
    %vm1696 = vcmp.eq.f32.partialorder %v1695, 8.507059e+37
    %v1697 = vand.u32 %v1685, 2147483648
    %v1698 = vor.u32 1.1754944e-38, %v1697
    %v1699 = vsel %vm1696, %v1698, %v1694
    %v1700 = vmul.f32 1.0, %v1699
    %v1701 = vmul.f32 %v1680, %v1583
    %v1702 = vmul.f32 %v1661, %v1681
    %v1703 = vadd.f32 %v1701, %v1702
    %v1704 = vtanh.pop %v1703
    %v1705 = vmul.f32 %v1700, %v1704
    %v1706 = vpack.c.bf16 %v1705, %v1705
    %1707 = vmatpush.bf16.msra.mxu0 %v1311
    %1708 = vmatpush.bf16.msra.mxu0 %v1307
    %1709 = vmatpush.bf16.msra.mxu0 %v1303
    %1710 = vmatpush.bf16.msra.mxu0 %v1299
    %1711 = vmatpush.bf16.msra.mxu0 %v1295
    %1712 = vmatpush.bf16.msra.mxu0 %v1291
    %1713 = vmatpush.bf16.msra.mxu0 %v1287
    %1714 = vmatpush.bf16.msra.mxu0 %v1283
    %1715 = vmatmul.bf16.gmra.mxu0 %v1706
    %v1716 = vpop.f32.mrf.mxu0
    %v1717 = vadd.f32 0.0, %v1716
    %v1718 = vpop.f32.mrf.mxu0
    %1719 = vdwg.mxu0
    %1720 = vmatpush.bf16.msra.mxu0 %v1312
    %1721 = vmatpush.bf16.msra.mxu0 %v1308
    %1722 = vmatpush.bf16.msra.mxu0 %v1304
    %1723 = vmatpush.bf16.msra.mxu0 %v1300
    %1724 = vmatpush.bf16.msra.mxu0 %v1296
    %1725 = vmatpush.bf16.msra.mxu0 %v1292
    %1726 = vmatpush.bf16.msra.mxu0 %v1288
    %1727 = vmatpush.bf16.msra.mxu0 %v1284
    %1728 = vmatmul.bf16.gmra.mxu0 %v1706
    %v1729 = vpop.f32.mrf.mxu0
    %v1730 = vadd.f32 0.0, %v1729
    %v1731 = vpop.f32.mrf.mxu0
    %1732 = vdwg.mxu0
    %1733 = vmatpush.bf16.msra.mxu0 %v1313
    %1734 = vmatpush.bf16.msra.mxu0 %v1309
    %1735 = vmatpush.bf16.msra.mxu0 %v1305
    %1736 = vmatpush.bf16.msra.mxu0 %v1301
    %1737 = vmatpush.bf16.msra.mxu0 %v1297
    %1738 = vmatpush.bf16.msra.mxu0 %v1293
    %1739 = vmatpush.bf16.msra.mxu0 %v1289
    %1740 = vmatpush.bf16.msra.mxu0 %v1285
    %1741 = vmatmul.bf16.gmra.mxu0 %v1706
    %v1742 = vpop.f32.mrf.mxu0
    %v1743 = vadd.f32 0.0, %v1742
    %v1744 = vpop.f32.mrf.mxu0
    %1745 = vdwg.mxu0
    %1746 = vmatpush.bf16.msra.mxu0 %v1314
    %1747 = vmatpush.bf16.msra.mxu0 %v1310
    %1748 = vmatpush.bf16.msra.mxu0 %v1306
    %1749 = vmatpush.bf16.msra.mxu0 %v1302
    %1750 = vmatpush.bf16.msra.mxu0 %v1298
    %1751 = vmatpush.bf16.msra.mxu0 %v1294
    %1752 = vmatpush.bf16.msra.mxu0 %v1290
    %1753 = vmatpush.bf16.msra.mxu0 %v1286
    %1754 = vmatmul.bf16.gmra.mxu0 %v1706
    %v1755 = vpop.f32.mrf.mxu0
    %v1756 = vadd.f32 0.0, %v1755
    %v1757 = vpop.f32.mrf.mxu0
    %1758 = vdwg.mxu0
    %v1759 = vadd.f32 %v1094, %v1717
    %v1760 = vadd.f32 %v1113, %v1730
    %v1761 = vadd.f32 %v1132, %v1743
    %v1762 = vadd.f32 %v1151, %v1756
    %v1763 = vxor.u32 %v1759, 2147483648
    %v1764 = vmul.f32 %v1763, 1.442695
    %v1765 = vpow.pop %v1764
    %v1766 = vadd.f32 %v1765, 1.0
    %v1767 = vrcp.pop %v1766
    %v1768 = vmul.f32 %v1766, %v1767
    %v1769 = vsub.f32 1.0, %v1768
    %v1770 = vmul.f32 %v1767, %v1769
    %v1771 = vadd.f32 %v1767, %v1770
    %vm1772 = vweird.f32 %v1766
    %vm1773 = vweird.f32 %v1767
    %vm1774 = vmor %vm1772, %vm1773
    %v1775 = vsel %vm1774, %v1767, %v1771
    %v1776 = vand.u32 2147483647, %v1766
    %vm1777 = vcmp.eq.f32.partialorder %v1776, 8.507059e+37
    %v1778 = vand.u32 %v1766, 2147483648
    %v1779 = vor.u32 1.1754944e-38, %v1778
    %v1780 = vsel %vm1777, %v1779, %v1775
    %v1781 = vmul.f32 1.0, %v1780
    %v1782 = vxor.u32 %v1760, 2147483648
    %v1783 = vmul.f32 %v1782, 1.442695
    %v1784 = vpow.pop %v1783
    %v1785 = vadd.f32 %v1784, 1.0
    %v1786 = vrcp.pop %v1785
    %v1787 = vmul.f32 %v1785, %v1786
    %v1788 = vsub.f32 1.0, %v1787
    %v1789 = vmul.f32 %v1786, %v1788
    %v1790 = vadd.f32 %v1786, %v1789
    %vm1791 = vweird.f32 %v1785
    %vm1792 = vweird.f32 %v1786
    %vm1793 = vmor %vm1791, %vm1792
    %v1794 = vsel %vm1793, %v1786, %v1790
    %v1795 = vand.u32 2147483647, %v1785
    %vm1796 = vcmp.eq.f32.partialorder %v1795, 8.507059e+37
    %v1797 = vand.u32 %v1785, 2147483648
    %v1798 = vor.u32 1.1754944e-38, %v1797
    %v1799 = vsel %vm1796, %v1798, %v1794
    %v1800 = vmul.f32 1.0, %v1799
    %v1801 = vtanh.pop %v1761
    %v1802 = vxor.u32 %v1762, 2147483648
    %v1803 = vmul.f32 %v1802, 1.442695
    %v1804 = vpow.pop %v1803
    %v1805 = vadd.f32 %v1804, 1.0
    %v1806 = vrcp.pop %v1805
    %v1807 = vmul.f32 %v1805, %v1806
    %v1808 = vsub.f32 1.0, %v1807
    %v1809 = vmul.f32 %v1806, %v1808
    %v1810 = vadd.f32 %v1806, %v1809
    %vm1811 = vweird.f32 %v1805
    %vm1812 = vweird.f32 %v1806
    %vm1813 = vmor %vm1811, %vm1812
    %v1814 = vsel %vm1813, %v1806, %v1810
    %v1815 = vand.u32 2147483647, %v1805
    %vm1816 = vcmp.eq.f32.partialorder %v1815, 8.507059e+37
    %v1817 = vand.u32 %v1805, 2147483648
    %v1818 = vor.u32 1.1754944e-38, %v1817
    %v1819 = vsel %vm1816, %v1818, %v1814
    %v1820 = vmul.f32 1.0, %v1819
    %v1821 = vmul.f32 %v1800, %v1703
    %v1822 = vmul.f32 %v1781, %v1801
    %v1823 = vadd.f32 %v1821, %v1822
    %v1824 = vtanh.pop %v1823
    %v1825 = vmul.f32 %v1820, %v1824
    %v1826 = vpack.c.bf16 %v1585, %v1465
    %v1827 = vpack.c.bf16 %v1825, %v1705
    %s1828 = smul.u32 %s871, 1
    %s1829 = sshll.u32 %s1828, 4
    %1830 = dma.done %s244, %s1829
    %v1831 = vld [vmem:[#allocation4] sm:$0xf]
    %v1832 = vld [vmem:[#allocation4 + $0x4] sm:$0xf]
    %v1833 = vld [vmem:[#allocation4 + $0x8] sm:$0xf]
    %v1834 = vld [vmem:[#allocation4 + $0xc] sm:$0xf]
    %v1835 = vld [vmem:[#allocation4 + $0x10] sm:$0xf]
    %v1836 = vld [vmem:[#allocation4 + $0x14] sm:$0xf]
    %v1837 = vld [vmem:[#allocation4 + $0x18] sm:$0xf]
    %v1838 = vld [vmem:[#allocation4 + $0x1c] sm:$0xf]
    %v1839 = vld [vmem:[#allocation4 + $0x20] sm:$0xf]
    %v1840 = vld [vmem:[#allocation4 + $0x24] sm:$0xf]
    %v1841 = vld [vmem:[#allocation4 + $0x28] sm:$0xf]
    %v1842 = vld [vmem:[#allocation4 + $0x2c] sm:$0xf]
    %v1843 = vld [vmem:[#allocation4 + $0x30] sm:$0xf]
    %v1844 = vld [vmem:[#allocation4 + $0x34] sm:$0xf]
    %v1845 = vld [vmem:[#allocation4 + $0x38] sm:$0xf]
    %v1846 = vld [vmem:[#allocation4 + $0x3c] sm:$0xf]
    %v1847 = vld [vmem:[#allocation11] sm:$0x1]
    %v1849 = vperm.slane %v1847, 0
    %v1867 = vunpack.c.l.b16 %v1831
    %v1868 = vunpack.c.l.b16 %v1832
    %v1869 = vunpack.c.l.b16 %v1833
    %v1870 = vunpack.c.l.b16 %v1834
    %v1871 = vunpack.c.l.b16 %v1835
    %v1872 = vunpack.c.l.b16 %v1836
    %v1873 = vunpack.c.l.b16 %v1837
    %v1874 = vunpack.c.l.b16 %v1838
    %v1875 = vunpack.c.l.b16 %v1839
    %v1876 = vunpack.c.l.b16 %v1840
    %v1877 = vunpack.c.l.b16 %v1841
    %v1878 = vunpack.c.l.b16 %v1842
    %v1879 = vunpack.c.l.b16 %v1843
    %v1880 = vunpack.c.l.b16 %v1844
    %v1881 = vunpack.c.l.b16 %v1845
    %v1882 = vunpack.c.l.b16 %v1846
    %v1883 = vpack.c.b16 %v1868, %v1867
    %v1884 = vpack.c.b16 %v1870, %v1869
    %v1885 = vpack.c.b16 %v1872, %v1871
    %v1886 = vpack.c.b16 %v1874, %v1873
    %v1887 = vpack.c.b16 %v1876, %v1875
    %v1888 = vpack.c.b16 %v1878, %v1877
    %v1889 = vpack.c.b16 %v1880, %v1879
    %v1890 = vpack.c.b16 %v1882, %v1881
    %1899 = vmatpush.bf16.msra.mxu0 %v1890
    %1900 = vmatpush.bf16.msra.mxu0 %v1889
    %1901 = vmatpush.bf16.msra.mxu0 %v1888
    %1902 = vmatpush.bf16.msra.mxu0 %v1887
    %1903 = vmatpush.bf16.msra.mxu0 %v1886
    %1904 = vmatpush.bf16.msra.mxu0 %v1885
    %1905 = vmatpush.bf16.msra.mxu0 %v1884
    %1906 = vmatpush.bf16.msra.mxu0 %v1883
    %1907 = vmatmul.bf16.gmra.mxu0 %v1826
    %v1908 = vpop.f32.mrf.mxu0
    %v1909 = vadd.f32 %v1849, %v1908
    %v1910 = vpop.f32.mrf.mxu0
    %v1911 = vadd.f32 %v1849, %v1910
    %1912 = vmatmul.bf16.gmra.mxu0 %v1827
    %v1913 = vpop.f32.mrf.mxu0
    %v1914 = vadd.f32 %v1849, %v1913
    %v1915 = vpop.f32.mrf.mxu0
    %v1916 = vadd.f32 %v1849, %v1915
    %1917 = vdwg.mxu0
    %v1918 = vmax.f32 %v1909, 0.0
    %v1919 = vmax.f32 %v1911, 0.0
    %v1920 = vmax.f32 %v1914, 0.0
    %v1921 = vmax.f32 %v1916, 0.0
    %v1922 = vpack.c.bf16 %v1919, %v1918
    %v1923 = vpack.c.bf16 %v1921, %v1920
    %s1924 = sshll.u32 %s1828, 4
    %1925 = dma.done %s277, %s1924
    %v1926 = vld [vmem:[#allocation5] sm:$0xf]
    %v1927 = vld [vmem:[#allocation5 + $0x4] sm:$0xf]
    %v1928 = vld [vmem:[#allocation5 + $0x8] sm:$0xf]
    %v1929 = vld [vmem:[#allocation5 + $0xc] sm:$0xf]
    %v1930 = vld [vmem:[#allocation5 + $0x10] sm:$0xf]
    %v1931 = vld [vmem:[#allocation5 + $0x14] sm:$0xf]
    %v1932 = vld [vmem:[#allocation5 + $0x18] sm:$0xf]
    %v1933 = vld [vmem:[#allocation5 + $0x1c] sm:$0xf]
    %v1934 = vld [vmem:[#allocation5 + $0x20] sm:$0xf]
    %v1935 = vld [vmem:[#allocation5 + $0x24] sm:$0xf]
    %v1936 = vld [vmem:[#allocation5 + $0x28] sm:$0xf]
    %v1937 = vld [vmem:[#allocation5 + $0x2c] sm:$0xf]
    %v1938 = vld [vmem:[#allocation5 + $0x30] sm:$0xf]
    %v1939 = vld [vmem:[#allocation5 + $0x34] sm:$0xf]
    %v1940 = vld [vmem:[#allocation5 + $0x38] sm:$0xf]
    %v1941 = vld [vmem:[#allocation5 + $0x3c] sm:$0xf]
    %v1942 = vld [vmem:[#allocation12] sm:$0x1]
    %v1944 = vperm.slane %v1942, 0
    %v1962 = vunpack.c.l.b16 %v1926
    %v1963 = vunpack.c.l.b16 %v1927
    %v1964 = vunpack.c.l.b16 %v1928
    %v1965 = vunpack.c.l.b16 %v1929
    %v1966 = vunpack.c.l.b16 %v1930
    %v1967 = vunpack.c.l.b16 %v1931
    %v1968 = vunpack.c.l.b16 %v1932
    %v1969 = vunpack.c.l.b16 %v1933
    %v1970 = vunpack.c.l.b16 %v1934
    %v1971 = vunpack.c.l.b16 %v1935
    %v1972 = vunpack.c.l.b16 %v1936
    %v1973 = vunpack.c.l.b16 %v1937
    %v1974 = vunpack.c.l.b16 %v1938
    %v1975 = vunpack.c.l.b16 %v1939
    %v1976 = vunpack.c.l.b16 %v1940
    %v1977 = vunpack.c.l.b16 %v1941
    %v1978 = vpack.c.b16 %v1963, %v1962
    %v1979 = vpack.c.b16 %v1965, %v1964
    %v1980 = vpack.c.b16 %v1967, %v1966
    %v1981 = vpack.c.b16 %v1969, %v1968
    %v1982 = vpack.c.b16 %v1971, %v1970
    %v1983 = vpack.c.b16 %v1973, %v1972
    %v1984 = vpack.c.b16 %v1975, %v1974
    %v1985 = vpack.c.b16 %v1977, %v1976
    %1994 = vmatpush.bf16.msra.mxu0 %v1985
    %1995 = vmatpush.bf16.msra.mxu0 %v1984
    %1996 = vmatpush.bf16.msra.mxu0 %v1983
    %1997 = vmatpush.bf16.msra.mxu0 %v1982
    %1998 = vmatpush.bf16.msra.mxu0 %v1981
    %1999 = vmatpush.bf16.msra.mxu0 %v1980
    %2000 = vmatpush.bf16.msra.mxu0 %v1979
    %2001 = vmatpush.bf16.msra.mxu0 %v1978
    %2002 = vmatmul.bf16.gmra.mxu0 %v1922
    %v2003 = vpop.f32.mrf.mxu0
    %v2004 = vadd.f32 %v1944, %v2003
    %v2005 = vpop.f32.mrf.mxu0
    %v2006 = vadd.f32 %v1944, %v2005
    %2007 = vmatmul.bf16.gmra.mxu0 %v1923
    %v2008 = vpop.f32.mrf.mxu0
    %v2009 = vadd.f32 %v1944, %v2008
    %v2010 = vpop.f32.mrf.mxu0
    %v2011 = vadd.f32 %v1944, %v2010
    %2012 = vdwg.mxu0
    %2013 = vst [vmem:[%s10] sm:$0xff] %v2004
    %2014 = vst [vmem:[%s10 + $0x8] sm:$0xff] %v2006
    %2015 = vst [vmem:[%s10 + $0x10] sm:$0xff] %v2009
    %2016 = vst [vmem:[%s10 + $0x18] sm:$0xff] %v2011
    // Predicated region
    $region103: #{kinematic_lstm_forward.1} parent=1 // pred_check
      _
    $region104: #{kinematic_lstm_forward.1} parent=1 // pred_check_branch
      %2018 = sbr.rel (0) target = $region106
    $region105: #{kinematic_lstm_forward.1} parent=1 // pred_region
      _
    $region106: #{kinematic_lstm_forward.1} parent=1 // pred_fallthru
      _
    // Predicated region
    $region107: #{kinematic_lstm_forward.1} parent=1 // pred_check
      _
    $region108: #{kinematic_lstm_forward.1} parent=1 // pred_check_branch
      %2020 = sbr.rel (0) target = $region110
    $region109: #{kinematic_lstm_forward.1} parent=1 // pred_region
      _
    $region110: #{kinematic_lstm_forward.1} parent=1 // pred_fallthru
      _
    %2021 = vsyncpa [#allocation8], 1
    %2022 = vsyncpa [#allocation10], 1
    %2023 = vsyncpa [#allocation13], 1
  %2024 = vsyncmov [#allocation6]
  %s2025 = vpop.sfrf %2024
  %p2026 = scmp.eq.s32.totalorder %s2025, 0
  %p2027 = pneg %p2026
  %2029 = shalt.err (%p2027)
  %s2030 = scalar_lea.sflag [#allocation6], 1
  %2031 = vsyncmov %s2030
  %s2032 = vpop.sfrf %2031
  %p2033 = scmp.eq.s32.totalorder %s2032, 0
  %p2034 = pneg %p2033
  %2036 = shalt.err (%p2034)
  %s2037 = scalar_lea.sflag [#allocation6], 2
  %2038 = vsyncmov %s2037
  %s2039 = vpop.sfrf %2038
  %p2040 = scmp.eq.s32.totalorder %s2039, 0
  %p2041 = pneg %p2040
  %2043 = shalt.err (%p2041)
  %s2044 = scalar_lea.sflag [#allocation6], 3
  %2045 = vsyncmov %s2044
  %s2046 = vpop.sfrf %2045
  %p2047 = scmp.eq.s32.totalorder %s2046, 0
  %p2048 = pneg %p2047
  %2050 = shalt.err (%p2048)

</llo_original>
